<compile_context>
chip_gen: v7x
topology: tpu7x:2x2x1
jax: 0.10.0
libtpu: 0.0.40
codegen_flags: <defaults>
</compile_context>

<pallas_src>
import jax
import jax.numpy as jnp
from jax import lax
from jax.experimental import pallas as pl
from jax.experimental.pallas import tpu as pltpu

NEG_SLOPE = 0.01      # nn.LeakyReLU default
BN_EPS = 1e-5         # nn.BatchNorm1d default
C_LAST = 128          # final layer's outputs padded to a full 128-lane vreg
TARGET_ROWS = 2048    # flattened rows per grid step (perf review: >= 1024-2048)


def _make_encoder_kernel(TB, L_pad, L_in, c_out, store_ncl):
    """Fused 4-block kernel for one batch tile of TB samples.

    TB: samples per grid step; L_pad: per-sample row stride (multiple of 8);
    L_in: true signal length; c_out: real output channels (64);
    store_ncl: True  -> store (TB, c_out, L_in-4) NCL directly (needs L_pad >= 128),
               False -> store compact (TB, L_pad, c_out) NLC (wrapper transposes).
    """
    M = TB * L_pad
    L_out = L_in - 4

    def kernel(x_ref,
               w1_ref, s1_ref, b1_ref,
               w2_ref, s2_ref, b2_ref,
               w3_ref, s3_ref, b3_ref,
               w4_ref, s4_ref, b4_ref,
               o_ref):
        # Row position within its sample, built in-kernel (no extra HBM input / DMA).
        pos = lax.broadcasted_iota(jnp.int32, (TB, L_pad, 1), 1).reshape(M, 1)
        mask_dn = pos >= 1        # hoisted left 'same'-pad mask, shared by all blocks

        def shift_dn(t):
            # t[r] <- t[r-1]; zero at each sample's first row (left 'same' pad).
            return jnp.where(mask_dn, pltpu.roll(t, shift=1, axis=0), 0.0)

        def shift_up(t, l_valid):
            # t[r] <- t[r+1]; zero at each sample's last valid row (right 'same' pad).
            return jnp.where(pos < l_valid - 1, pltpu.roll(t, shift=M - 1, axis=0), 0.0)

        def bn_act_pool(acc, s_ref, b_ref):
            y = acc * s_ref[...] + b_ref[...]              # folded eval BN (+ conv bias)
            y = jnp.where(y > 0, y, NEG_SLOPE * y)         # LeakyReLU
            y_next = pltpu.roll(y, shift=M - 1, axis=0)    # row r+1 via XLU rotate
            return jnp.maximum(y, y_next)                  # MaxPool1d(2,1); valid len -1

        # ---- block 1: Conv1d(1 -> 32). C_in == 1 -> VPU broadcast MACs, no MXU.
        # Shift the raw (M,1) column (not a full slab) before the 32-lane broadcast.
        x = x_ref[...]                                     # (M, 1) f32
        acc = (shift_dn(x) * w1_ref[0:1, :]
               + x * w1_ref[1:2, :]
               + shift_up(x, L_in) * w1_ref[2:3, :])       # (M, 32)
        y = bn_act_pool(acc, s1_ref, b1_ref)
        l_valid = L_in - 1                                 # valid rows after block 1

        # ---- blocks 2..4: tap-stacked Conv1d(k=3,'same') as ONE MXU matmul each.
        # K = 3*C_in (96 / 192 / 384), zero-padded to a multiple of 128; activations
        # and weights go to the MXU as bf16, accumulation stays f32.
        for w_ref, s_ref, b_ref in ((w2_ref, s2_ref, b2_ref),
                                    (w3_ref, s3_ref, b3_ref),
                                    (w4_ref, s4_ref, b4_ref)):
            ci = y.shape[-1]
            pieces = [shift_dn(y), y, shift_up(y, l_valid)]
            kpad = (-3 * ci) % 128
            if kpad:
                pieces.append(jnp.zeros((M, kpad), jnp.float32))
            stack = jnp.concatenate(pieces, axis=1).astype(jnp.bfloat16)
            acc = jnp.dot(stack, w_ref[...], preferred_element_type=jnp.float32)
            y = bn_act_pool(acc, s_ref, b_ref)
            l_valid -= 1
        # NOTE: rows with pos >= l_valid (and padded batch samples) hold garbage here;
        # the shift masks keep it out of valid rows and the stores below / the wrapper
        # never emit it.

        y3 = y.reshape(TB, L_pad, C_LAST)
        if store_ncl:
            # Store NCL directly: per-sample (rows, chan) -> (chan, rows) using only
            # full 128x128 XLU transposes, writing just the real (c_out, L_out) window.
            for lo in range(0, L_out, 128):
                w_sz = min(128, L_out - lo)
                src_lo = min(lo, L_pad - 128)      # keep the 128-row window in bounds
                off = lo - src_lo
                blk = jnp.swapaxes(y3[:, src_lo:src_lo + 128, :], 1, 2)  # (TB,128,128)
                o_ref[:, :, lo:lo + w_sz] = (
                    blk[:, :c_out, off:off + w_sz].astype(o_ref.dtype))
        else:
            # Short-signal path: compact channels-last store; the wrapper does the
            # (tiny) slice + transpose to NCL.
            o_ref[...] = y3[:, :, :c_out].astype(o_ref.dtype)

    return kernel


def _choose_tb(B, L_pad):
    """Samples per grid step: target ~TARGET_ROWS flattened rows (big tiles amortise
    the per-step overhead and feed the MXU a large M), but keep >= 2 grid steps when
    B >= 2 so the 'parallel' batch axis can shard across both TensorCores on v7x."""
    tb = max(1, TARGET_ROWS // L_pad)
    tb = min(tb, B)
    if B >= 2:
        tb = min(tb, (B + 1) // 2)
    return max(tb, 1)


def signal_encoder(x_ncl, params):
    """x_ncl: (B, 1, L) PyTorch NCL -> (B, 64, L-4) PyTorch NCL (eval-mode)."""
    B, c_in, L = x_ncl.shape
    assert c_in == 1 and len(params) == 4 and L >= 5
    c_out = params[-1][0].shape[2]                   # 64
    L_out = L - 4                                    # four MaxPool1d(2,1)
    L_pad = ((L + 7) // 8) * 8                       # per-sample row stride
    TB = _choose_tb(B, L_pad)
    B_pad = -(-B // TB) * TB                         # pad batch instead of TB=1 fallback
    M_blk = TB * L_pad
    store_ncl = L_pad >= 128                         # in-kernel NCL store needs 128-row granules
    # TODO(synk): very long signals (L_pad rows ~>> VMEM budget) would additionally
    # need L-tiling with halos; each grid step holds the full signal length in VMEM.

    # Input: (B,1,L) -> flattened channels-last rows (B_pad*L_pad, 1). C_in == 1 so the
    # transpose is layout-free; pad rows/samples are masked off inside the kernel.
    x = jnp.transpose(x_ncl, (0, 2, 1))
    x = jnp.pad(x, ((0, B_pad - B), (0, L_pad - L), (0, 0))).reshape(B_pad * L_pad, 1)

    # Parameter packing:
    #  * layer 1 stays f32 on the VPU: (3, 32) taps + (1, 32) scale/bias.
    #  * layers 2-4: taps stacked along K -> (3*C_in, C_out), K zero-padded to a
    #    multiple of 128, cast to bf16 for the MXU.  The final layer's outputs are
    #    zero-padded to 128 lanes so the output transpose uses full vregs.
    w1, s1, b1 = params[0]
    packed = [w1[:, 0, :], s1.reshape(1, -1), b1.reshape(1, -1)]
    for li, (w, s, b) in enumerate(params[1:]):
        ci, co = w.shape[1], w.shape[2]
        co_pad = (C_LAST - co) if li == 2 else 0
        kpad = (-3 * ci) % 128
        w_stack = jnp.pad(w.reshape(3 * ci, co), ((0, kpad), (0, co_pad)))
        packed += [w_stack.astype(jnp.bfloat16),
                   jnp.pad(s.reshape(1, -1), ((0, 0), (0, co_pad))),
                   jnp.pad(b.reshape(1, -1), ((0, 0), (0, co_pad)))]

    def _const_spec(shape):
        zeros = (0,) * len(shape)
        return pl.BlockSpec(shape, lambda i: zeros)

    if store_ncl:
        out_shape = jax.ShapeDtypeStruct((B_pad, c_out, L_out), jnp.float32)
        out_spec = pl.BlockSpec((TB, c_out, L_out), lambda i: (i, 0, 0))
    else:
        out_shape = jax.ShapeDtypeStruct((B_pad, L_pad, c_out), jnp.float32)
        out_spec = pl.BlockSpec((TB, L_pad, c_out), lambda i: (i, 0, 0))

    out = pl.pallas_call(
        _make_encoder_kernel(TB, L_pad, L, c_out, store_ncl),
        out_shape=out_shape,
        grid_spec=pltpu.PrefetchScalarGridSpec(
            num_scalar_prefetch=0,
            grid=(B_pad // TB,),
            in_specs=[pl.BlockSpec((M_blk, 1), lambda i: (i, 0))]
                     + [_const_spec(a.shape) for a in packed],
            out_specs=out_spec,
        ),
        compiler_params=pltpu.CompilerParams(
            dimension_semantics=("parallel",),
            vmem_limit_bytes=32 * 1024 * 1024),
    )(x, *packed)

    if not store_ncl:
        out = jnp.transpose(out[:, :L_out, :], (0, 2, 1))
    return out[:B] if B_pad != B else out


def init_params(key):
    # SignalEncoder channel plan: 1 -> 32 -> 64 -> 128 -> 64 (input_dim)
    chans = [(1, 32), (32, 64), (64, 128), (128, 64)]
    params = []
    for cin, cout in chans:
        key, kw, kb, kg, kbeta = jax.random.split(key, 5)
        w = 0.1 * jax.random.normal(kw, (3, cin, cout), jnp.float32)   # (K, C_in, C_out)
        conv_b = 0.1 * jax.random.normal(kb, (cout,), jnp.float32)
        gamma = 1.0 + 0.1 * jax.random.normal(kg, (cout,), jnp.float32)
        beta = 0.1 * jax.random.normal(kbeta, (cout,), jnp.float32)
        running_mean = jnp.zeros((cout,), jnp.float32)                 # BN default init
        running_var = jnp.ones((cout,), jnp.float32)
        # Fold eval-mode BatchNorm1d (+ conv bias) into per-channel scale/bias.
        # TODO(synk): training-mode BN (batch statistics over (B, L)) not implemented;
        # this reproduces eval()/inference semantics with running stats.
        s = gamma / jnp.sqrt(running_var + BN_EPS)
        b = beta + (conv_b - running_mean) * s
        params.append((w, s, b))
    return params


# ---------------- pure-JAX f32 reference (for correctness check) ----------------
def _ref_encoder(x_ncl, params):
    x = jnp.transpose(x_ncl, (0, 2, 1))            # (B, L, C)
    for w, s, b in params:
        B, L, _ = x.shape
        xp = jnp.pad(x, ((0, 0), (1, 1), (0, 0)))  # 'same' padding, k=3
        y = sum(jnp.einsum('blc,cd->bld', xp[:, k:k + L, :], w[k]) for k in range(3))
        y = y * s + b
        y = jnp.where(y > 0, y, NEG_SLOPE * y)
        x = jnp.maximum(y[:, :-1, :], y[:, 1:, :])  # MaxPool1d(2, 1)
    return jnp.transpose(x, (0, 2, 1))


if __name__ == "__main__":
    key = jax.random.PRNGKey(0)
    kx, kp = jax.random.split(key)
    B, L = 2, 16
    x = jax.random.normal(kx, (B, 1, L), jnp.float32)   # PyTorch NCL: (batch, 1, length)
    params = init_params(kp)

    out = jax.jit(signal_encoder)(x, params)
    out = jax.block_until_ready(out)

    ref = _ref_encoder(x, params)
    assert out.shape == (B, 64, L - 4), out.shape       # 4x MaxPool1d(2,1) -> L-4
    # Tolerance loosened vs the f32 reference because conv blocks 2-4 run bf16 on the
    # MXU (f32 accumulation); structural errors would show up as O(0.1-1) differences.
    assert jnp.allclose(out, ref, atol=3e-2, rtol=3e-2), \
        float(jnp.max(jnp.abs(out - ref)))
    print("KERNEL_OK")
</pallas_src>

<mosaic_0001>
module attributes {stable_mosaic.version = 11 : i64} {
  func.func @kernel(%arg0: i32, %arg1: memref<16x1xf32, #tpu.memory_space<vmem>>, %arg2: memref<3x32xf32, #tpu.memory_space<vmem>>, %arg3: memref<1x32xf32, #tpu.memory_space<vmem>>, %arg4: memref<1x32xf32, #tpu.memory_space<vmem>>, %arg5: memref<128x64xbf16, #tpu.memory_space<vmem>>, %arg6: memref<1x64xf32, #tpu.memory_space<vmem>>, %arg7: memref<1x64xf32, #tpu.memory_space<vmem>>, %arg8: memref<256x128xbf16, #tpu.memory_space<vmem>>, %arg9: memref<1x128xf32, #tpu.memory_space<vmem>>, %arg10: memref<1x128xf32, #tpu.memory_space<vmem>>, %arg11: memref<384x128xbf16, #tpu.memory_space<vmem>>, %arg12: memref<1x128xf32, #tpu.memory_space<vmem>>, %arg13: memref<1x128xf32, #tpu.memory_space<vmem>>, %arg14: memref<1x16x64xf32, #tpu.memory_space<vmem>>) attributes {dimension_semantics = [#tpu.dimension_semantics<parallel>], iteration_bounds = array<i64: 2>, scalar_prefetch = 0 : i64, scratch_operands = 0 : i64, tpu.core_type = #tpu.core_type<tc>, window_params = [{transform_indices = @transform_0, window_bounds = array<i64: 16, 1>}, {pipeline_mode = #tpu.pipeline_mode<synchronous>, transform_indices = @transform_1, window_bounds = array<i64: 3, 32>}, {pipeline_mode = #tpu.pipeline_mode<synchronous>, transform_indices = @transform_2, window_bounds = array<i64: 1, 32>}, {pipeline_mode = #tpu.pipeline_mode<synchronous>, transform_indices = @transform_3, window_bounds = array<i64: 1, 32>}, {pipeline_mode = #tpu.pipeline_mode<synchronous>, transform_indices = @transform_4, window_bounds = array<i64: 128, 64>}, {pipeline_mode = #tpu.pipeline_mode<synchronous>, transform_indices = @transform_5, window_bounds = array<i64: 1, 64>}, {pipeline_mode = #tpu.pipeline_mode<synchronous>, transform_indices = @transform_6, window_bounds = array<i64: 1, 64>}, {pipeline_mode = #tpu.pipeline_mode<synchronous>, transform_indices = @transform_7, window_bounds = array<i64: 256, 128>}, {pipeline_mode = #tpu.pipeline_mode<synchronous>, transform_indices = @transform_8, window_bounds = array<i64: 1, 128>}, {pipeline_mode = #tpu.pipeline_mode<synchronous>, transform_indices = @transform_9, window_bounds = array<i64: 1, 128>}, {pipeline_mode = #tpu.pipeline_mode<synchronous>, transform_indices = @transform_10, window_bounds = array<i64: 384, 128>}, {pipeline_mode = #tpu.pipeline_mode<synchronous>, transform_indices = @transform_11, window_bounds = array<i64: 1, 128>}, {pipeline_mode = #tpu.pipeline_mode<synchronous>, transform_indices = @transform_12, window_bounds = array<i64: 1, 128>}, {transform_indices = @transform_13, window_bounds = array<i64: 1, 16, 64>}]} {
    %0 = tpu.iota {dimensions = array<i32: 1>} : vector<1x16x1xi32>
    %1 = vector.shape_cast %0 : vector<1x16x1xi32> to vector<16x1xi32>
    %c1_i32 = arith.constant 1 : i32
    %2 = vector.broadcast %c1_i32 : i32 to vector<16x1xi32>
    %3 = arith.cmpi sge, %1, %2 : vector<16x1xi32>
    %c0 = arith.constant 0 : index
    %c0_0 = arith.constant 0 : index
    %4 = vector.load %arg1[%c0, %c0_0] : memref<16x1xf32, #tpu.memory_space<vmem>>, vector<16x1xf32>
    %c1_i32_1 = arith.constant 1 : i32
    %5 = tpu.dynamic_rotate %4 by %c1_i32_1 dim 0 : vector<16x1xf32>, i32 -> vector<16x1xf32>
    %cst = arith.constant 0.000000e+00 : f32
    %6 = vector.broadcast %cst : f32 to vector<16x1xf32>
    %7 = arith.select %3, %5, %6 : vector<16x1xi1>, vector<16x1xf32>
    %c0_2 = arith.constant 0 : index
    %c0_3 = arith.constant 0 : index
    %8 = vector.load %arg2[%c0_2, %c0_3] : memref<3x32xf32, #tpu.memory_space<vmem>>, vector<1x32xf32>
    %9 = vector.broadcast %7 : vector<16x1xf32> to vector<16x32xf32>
    %10 = vector.broadcast %8 : vector<1x32xf32> to vector<16x32xf32>
    %11 = arith.mulf %9, %10 : vector<16x32xf32>
    %c1 = arith.constant 1 : index
    %c0_4 = arith.constant 0 : index
    %12 = vector.load %arg2[%c1, %c0_4] : memref<3x32xf32, #tpu.memory_space<vmem>>, vector<1x32xf32>
    %13 = vector.broadcast %4 : vector<16x1xf32> to vector<16x32xf32>
    %14 = vector.broadcast %12 : vector<1x32xf32> to vector<16x32xf32>
    %15 = arith.mulf %13, %14 : vector<16x32xf32>
    %16 = arith.addf %11, %15 : vector<16x32xf32>
    %c15_i32 = arith.constant 15 : i32
    %17 = vector.broadcast %c15_i32 : i32 to vector<16x1xi32>
    %18 = arith.cmpi slt, %1, %17 : vector<16x1xi32>
    %c15_i32_5 = arith.constant 15 : i32
    %19 = tpu.dynamic_rotate %4 by %c15_i32_5 dim 0 : vector<16x1xf32>, i32 -> vector<16x1xf32>
    %cst_6 = arith.constant 0.000000e+00 : f32
    %20 = vector.broadcast %cst_6 : f32 to vector<16x1xf32>
    %21 = arith.select %18, %19, %20 : vector<16x1xi1>, vector<16x1xf32>
    %c2 = arith.constant 2 : index
    %c0_7 = arith.constant 0 : index
    %22 = vector.load %arg2[%c2, %c0_7] : memref<3x32xf32, #tpu.memory_space<vmem>>, vector<1x32xf32>
    %23 = vector.broadcast %21 : vector<16x1xf32> to vector<16x32xf32>
    %24 = vector.broadcast %22 : vector<1x32xf32> to vector<16x32xf32>
    %25 = arith.mulf %23, %24 : vector<16x32xf32>
    %26 = arith.addf %16, %25 : vector<16x32xf32>
    %c0_8 = arith.constant 0 : index
    %c0_9 = arith.constant 0 : index
    %27 = vector.load %arg3[%c0_8, %c0_9] : memref<1x32xf32, #tpu.memory_space<vmem>>, vector<1x32xf32>
    %28 = vector.broadcast %27 : vector<1x32xf32> to vector<16x32xf32>
    %29 = arith.mulf %26, %28 : vector<16x32xf32>
    %c0_10 = arith.constant 0 : index
    %c0_11 = arith.constant 0 : index
    %30 = vector.load %arg4[%c0_10, %c0_11] : memref<1x32xf32, #tpu.memory_space<vmem>>, vector<1x32xf32>
    %31 = vector.broadcast %30 : vector<1x32xf32> to vector<16x32xf32>
    %32 = arith.addf %29, %31 : vector<16x32xf32>
    %cst_12 = arith.constant 0.000000e+00 : f32
    %33 = vector.broadcast %cst_12 : f32 to vector<16x32xf32>
    %34 = arith.cmpf ogt, %32, %33 : vector<16x32xf32>
    %cst_13 = arith.constant 0.00999999977 : f32
    %35 = vector.broadcast %cst_13 : f32 to vector<16x32xf32>
    %36 = arith.mulf %35, %32 : vector<16x32xf32>
    %37 = arith.select %34, %32, %36 : vector<16x32xi1>, vector<16x32xf32>
    %c15_i32_14 = arith.constant 15 : i32
    %38 = tpu.dynamic_rotate %37 by %c15_i32_14 dim 0 : vector<16x32xf32>, i32 -> vector<16x32xf32>
    %39 = arith.maximumf %37, %38 : vector<16x32xf32>
    %c1_i32_15 = arith.constant 1 : i32
    %40 = tpu.dynamic_rotate %39 by %c1_i32_15 dim 0 : vector<16x32xf32>, i32 -> vector<16x32xf32>
    %cst_16 = arith.constant 0.000000e+00 : f32
    %41 = vector.shape_cast %3 : vector<16x1xi1> to vector<16x1xi1>
    %42 = vector.broadcast %41 : vector<16x1xi1> to vector<16x32xi1>
    %43 = vector.broadcast %cst_16 : f32 to vector<16x32xf32>
    %44 = arith.select %42, %40, %43 : vector<16x32xi1>, vector<16x32xf32>
    %c14_i32 = arith.constant 14 : i32
    %45 = vector.broadcast %c14_i32 : i32 to vector<16x1xi32>
    %46 = arith.cmpi slt, %1, %45 : vector<16x1xi32>
    %c15_i32_17 = arith.constant 15 : i32
    %47 = tpu.dynamic_rotate %39 by %c15_i32_17 dim 0 : vector<16x32xf32>, i32 -> vector<16x32xf32>
    %cst_18 = arith.constant 0.000000e+00 : f32
    %48 = vector.shape_cast %46 : vector<16x1xi1> to vector<16x1xi1>
    %49 = vector.broadcast %48 : vector<16x1xi1> to vector<16x32xi1>
    %50 = vector.broadcast %cst_18 : f32 to vector<16x32xf32>
    %51 = arith.select %49, %47, %50 : vector<16x32xi1>, vector<16x32xf32>
    %cst_19 = arith.constant 0.000000e+00 : f32
    %52 = vector.broadcast %cst_19 : f32 to vector<16x32xf32>
    %53 = tpu.concatenate %44, %39, %51, %52 in 1 : vector<16x32xf32>, vector<16x32xf32>, vector<16x32xf32>, vector<16x32xf32> -> vector<16x128xf32>
    %54 = arith.truncf %53 : vector<16x128xf32> to vector<16x128xbf16>
    %c0_20 = arith.constant 0 : index
    %c0_21 = arith.constant 0 : index
    %55 = vector.load %arg5[%c0_20, %c0_21] : memref<128x64xbf16, #tpu.memory_space<vmem>>, vector<128x64xbf16>
    %cst_22 = arith.constant dense<0.000000e+00> : vector<16x64xf32>
    %56 = tpu.matmul %54, %55, %cst_22 {dimension_numbers = #tpu.dot_dimension_numbers<[1], [0], [0], [1], [0, 0, 1, 1], [], []>} : vector<16x128xbf16>, vector<128x64xbf16>, vector<16x64xf32> -> vector<16x64xf32>
    %c0_23 = arith.constant 0 : index
    %c0_24 = arith.constant 0 : index
    %57 = vector.load %arg6[%c0_23, %c0_24] : memref<1x64xf32, #tpu.memory_space<vmem>>, vector<1x64xf32>
    %58 = vector.broadcast %57 : vector<1x64xf32> to vector<16x64xf32>
    %59 = arith.mulf %56, %58 : vector<16x64xf32>
    %c0_25 = arith.constant 0 : index
    %c0_26 = arith.constant 0 : index
    %60 = vector.load %arg7[%c0_25, %c0_26] : memref<1x64xf32, #tpu.memory_space<vmem>>, vector<1x64xf32>
    %61 = vector.broadcast %60 : vector<1x64xf32> to vector<16x64xf32>
    %62 = arith.addf %59, %61 : vector<16x64xf32>
    %cst_27 = arith.constant 0.000000e+00 : f32
    %63 = vector.broadcast %cst_27 : f32 to vector<16x64xf32>
    %64 = arith.cmpf ogt, %62, %63 : vector<16x64xf32>
    %cst_28 = arith.constant 0.00999999977 : f32
    %65 = vector.broadcast %cst_28 : f32 to vector<16x64xf32>
    %66 = arith.mulf %65, %62 : vector<16x64xf32>
    %67 = arith.select %64, %62, %66 : vector<16x64xi1>, vector<16x64xf32>
    %c15_i32_29 = arith.constant 15 : i32
    %68 = tpu.dynamic_rotate %67 by %c15_i32_29 dim 0 : vector<16x64xf32>, i32 -> vector<16x64xf32>
    %69 = arith.maximumf %67, %68 : vector<16x64xf32>
    %c1_i32_30 = arith.constant 1 : i32
    %70 = tpu.dynamic_rotate %69 by %c1_i32_30 dim 0 : vector<16x64xf32>, i32 -> vector<16x64xf32>
    %cst_31 = arith.constant 0.000000e+00 : f32
    %71 = vector.shape_cast %3 : vector<16x1xi1> to vector<16x1xi1>
    %72 = vector.broadcast %71 : vector<16x1xi1> to vector<16x64xi1>
    %73 = vector.broadcast %cst_31 : f32 to vector<16x64xf32>
    %74 = arith.select %72, %70, %73 : vector<16x64xi1>, vector<16x64xf32>
    %c13_i32 = arith.constant 13 : i32
    %75 = vector.broadcast %c13_i32 : i32 to vector<16x1xi32>
    %76 = arith.cmpi slt, %1, %75 : vector<16x1xi32>
    %c15_i32_32 = arith.constant 15 : i32
    %77 = tpu.dynamic_rotate %69 by %c15_i32_32 dim 0 : vector<16x64xf32>, i32 -> vector<16x64xf32>
    %cst_33 = arith.constant 0.000000e+00 : f32
    %78 = vector.shape_cast %76 : vector<16x1xi1> to vector<16x1xi1>
    %79 = vector.broadcast %78 : vector<16x1xi1> to vector<16x64xi1>
    %80 = vector.broadcast %cst_33 : f32 to vector<16x64xf32>
    %81 = arith.select %79, %77, %80 : vector<16x64xi1>, vector<16x64xf32>
    %cst_34 = arith.constant 0.000000e+00 : f32
    %82 = vector.broadcast %cst_34 : f32 to vector<16x64xf32>
    %83 = tpu.concatenate %74, %69, %81, %82 in 1 : vector<16x64xf32>, vector<16x64xf32>, vector<16x64xf32>, vector<16x64xf32> -> vector<16x256xf32>
    %84 = arith.truncf %83 : vector<16x256xf32> to vector<16x256xbf16>
    %c0_35 = arith.constant 0 : index
    %c0_36 = arith.constant 0 : index
    %85 = vector.load %arg8[%c0_35, %c0_36] : memref<256x128xbf16, #tpu.memory_space<vmem>>, vector<256x128xbf16>
    %cst_37 = arith.constant dense<0.000000e+00> : vector<16x128xf32>
    %86 = tpu.matmul %84, %85, %cst_37 {dimension_numbers = #tpu.dot_dimension_numbers<[1], [0], [0], [1], [0, 0, 1, 1], [], []>} : vector<16x256xbf16>, vector<256x128xbf16>, vector<16x128xf32> -> vector<16x128xf32>
    %c0_38 = arith.constant 0 : index
    %c0_39 = arith.constant 0 : index
    %87 = vector.load %arg9[%c0_38, %c0_39] : memref<1x128xf32, #tpu.memory_space<vmem>>, vector<1x128xf32>
    %88 = vector.broadcast %87 : vector<1x128xf32> to vector<16x128xf32>
    %89 = arith.mulf %86, %88 : vector<16x128xf32>
    %c0_40 = arith.constant 0 : index
    %c0_41 = arith.constant 0 : index
    %90 = vector.load %arg10[%c0_40, %c0_41] : memref<1x128xf32, #tpu.memory_space<vmem>>, vector<1x128xf32>
    %91 = vector.broadcast %90 : vector<1x128xf32> to vector<16x128xf32>
    %92 = arith.addf %89, %91 : vector<16x128xf32>
    %cst_42 = arith.constant 0.000000e+00 : f32
    %93 = vector.broadcast %cst_42 : f32 to vector<16x128xf32>
    %94 = arith.cmpf ogt, %92, %93 : vector<16x128xf32>
    %cst_43 = arith.constant 0.00999999977 : f32
    %95 = vector.broadcast %cst_43 : f32 to vector<16x128xf32>
    %96 = arith.mulf %95, %92 : vector<16x128xf32>
    %97 = arith.select %94, %92, %96 : vector<16x128xi1>, vector<16x128xf32>
    %c15_i32_44 = arith.constant 15 : i32
    %98 = tpu.dynamic_rotate %97 by %c15_i32_44 dim 0 : vector<16x128xf32>, i32 -> vector<16x128xf32>
    %99 = arith.maximumf %97, %98 : vector<16x128xf32>
    %c1_i32_45 = arith.constant 1 : i32
    %100 = tpu.dynamic_rotate %99 by %c1_i32_45 dim 0 : vector<16x128xf32>, i32 -> vector<16x128xf32>
    %cst_46 = arith.constant 0.000000e+00 : f32
    %101 = vector.shape_cast %3 : vector<16x1xi1> to vector<16x1xi1>
    %102 = vector.broadcast %101 : vector<16x1xi1> to vector<16x128xi1>
    %103 = vector.broadcast %cst_46 : f32 to vector<16x128xf32>
    %104 = arith.select %102, %100, %103 : vector<16x128xi1>, vector<16x128xf32>
    %c12_i32 = arith.constant 12 : i32
    %105 = vector.broadcast %c12_i32 : i32 to vector<16x1xi32>
    %106 = arith.cmpi slt, %1, %105 : vector<16x1xi32>
    %c15_i32_47 = arith.constant 15 : i32
    %107 = tpu.dynamic_rotate %99 by %c15_i32_47 dim 0 : vector<16x128xf32>, i32 -> vector<16x128xf32>
    %cst_48 = arith.constant 0.000000e+00 : f32
    %108 = vector.shape_cast %106 : vector<16x1xi1> to vector<16x1xi1>
    %109 = vector.broadcast %108 : vector<16x1xi1> to vector<16x128xi1>
    %110 = vector.broadcast %cst_48 : f32 to vector<16x128xf32>
    %111 = arith.select %109, %107, %110 : vector<16x128xi1>, vector<16x128xf32>
    %112 = tpu.concatenate %104, %99, %111 in 1 : vector<16x128xf32>, vector<16x128xf32>, vector<16x128xf32> -> vector<16x384xf32>
    %113 = arith.truncf %112 : vector<16x384xf32> to vector<16x384xbf16>
    %c0_49 = arith.constant 0 : index
    %c0_50 = arith.constant 0 : index
    %114 = vector.load %arg11[%c0_49, %c0_50] : memref<384x128xbf16, #tpu.memory_space<vmem>>, vector<384x128xbf16>
    %cst_51 = arith.constant dense<0.000000e+00> : vector<16x128xf32>
    %115 = tpu.matmul %113, %114, %cst_51 {dimension_numbers = #tpu.dot_dimension_numbers<[1], [0], [0], [1], [0, 0, 1, 1], [], []>} : vector<16x384xbf16>, vector<384x128xbf16>, vector<16x128xf32> -> vector<16x128xf32>
    %c0_52 = arith.constant 0 : index
    %c0_53 = arith.constant 0 : index
    %116 = vector.load %arg12[%c0_52, %c0_53] : memref<1x128xf32, #tpu.memory_space<vmem>>, vector<1x128xf32>
    %117 = vector.broadcast %116 : vector<1x128xf32> to vector<16x128xf32>
    %118 = arith.mulf %115, %117 : vector<16x128xf32>
    %c0_54 = arith.constant 0 : index
    %c0_55 = arith.constant 0 : index
    %119 = vector.load %arg13[%c0_54, %c0_55] : memref<1x128xf32, #tpu.memory_space<vmem>>, vector<1x128xf32>
    %120 = vector.broadcast %119 : vector<1x128xf32> to vector<16x128xf32>
    %121 = arith.addf %118, %120 : vector<16x128xf32>
    %cst_56 = arith.constant 0.000000e+00 : f32
    %122 = vector.broadcast %cst_56 : f32 to vector<16x128xf32>
    %123 = arith.cmpf ogt, %121, %122 : vector<16x128xf32>
    %cst_57 = arith.constant 0.00999999977 : f32
    %124 = vector.broadcast %cst_57 : f32 to vector<16x128xf32>
    %125 = arith.mulf %124, %121 : vector<16x128xf32>
    %126 = arith.select %123, %121, %125 : vector<16x128xi1>, vector<16x128xf32>
    %c15_i32_58 = arith.constant 15 : i32
    %127 = tpu.dynamic_rotate %126 by %c15_i32_58 dim 0 : vector<16x128xf32>, i32 -> vector<16x128xf32>
    %128 = arith.maximumf %126, %127 : vector<16x128xf32>
    %129 = vector.shape_cast %128 : vector<16x128xf32> to vector<1x16x128xf32>
    %130 = vector.extract_strided_slice %129 {offsets = [0, 0, 0], sizes = [1, 16, 64], strides = [1, 1, 1]} : vector<1x16x128xf32> to vector<1x16x64xf32>
    %c0_59 = arith.constant 0 : index
    %c0_60 = arith.constant 0 : index
    %c0_61 = arith.constant 0 : index
    %131 = vector.load %arg14[%c0_59, %c0_60, %c0_61] : memref<1x16x64xf32, #tpu.memory_space<vmem>>, vector<1x16x64xf32>
    tpu.vector_store %arg14[%c0_59, %c0_60, %c0_61], %130 {strides = array<i32>} : memref<1x16x64xf32, #tpu.memory_space<vmem>>, vector<1x16x64xf32>,
    return
  }
  func.func @transform_0(%arg0: i32) -> (i32, i32) {
    %c0_i32 = arith.constant 0 : i32
    %c0_i32_0 = arith.constant 0 : i32
    return %arg0, %c0_i32 : i32, i32
  }
  func.func @transform_1(%arg0: i32) -> (i32, i32) {
    %c0_i32 = arith.constant 0 : i32
    %c0_i32_0 = arith.constant 0 : i32
    %c0_i32_1 = arith.constant 0 : i32
    return %c0_i32, %c0_i32_0 : i32, i32
  }
  func.func @transform_2(%arg0: i32) -> (i32, i32) {
    %c0_i32 = arith.constant 0 : i32
    %c0_i32_0 = arith.constant 0 : i32
    %c0_i32_1 = arith.constant 0 : i32
    return %c0_i32, %c0_i32_0 : i32, i32
  }
  func.func @transform_3(%arg0: i32) -> (i32, i32) {
    %c0_i32 = arith.constant 0 : i32
    %c0_i32_0 = arith.constant 0 : i32
    %c0_i32_1 = arith.constant 0 : i32
    return %c0_i32, %c0_i32_0 : i32, i32
  }
  func.func @transform_4(%arg0: i32) -> (i32, i32) {
    %c0_i32 = arith.constant 0 : i32
    %c0_i32_0 = arith.constant 0 : i32
    %c0_i32_1 = arith.constant 0 : i32
    return %c0_i32, %c0_i32_0 : i32, i32
  }
  func.func @transform_5(%arg0: i32) -> (i32, i32) {
    %c0_i32 = arith.constant 0 : i32
    %c0_i32_0 = arith.constant 0 : i32
    %c0_i32_1 = arith.constant 0 : i32
    return %c0_i32, %c0_i32_0 : i32, i32
  }
  func.func @transform_6(%arg0: i32) -> (i32, i32) {
    %c0_i32 = arith.constant 0 : i32
    %c0_i32_0 = arith.constant 0 : i32
    %c0_i32_1 = arith.constant 0 : i32
    return %c0_i32, %c0_i32_0 : i32, i32
  }
  func.func @transform_7(%arg0: i32) -> (i32, i32) {
    %c0_i32 = arith.constant 0 : i32
    %c0_i32_0 = arith.constant 0 : i32
    %c0_i32_1 = arith.constant 0 : i32
    return %c0_i32, %c0_i32_0 : i32, i32
  }
  func.func @transform_8(%arg0: i32) -> (i32, i32) {
    %c0_i32 = arith.constant 0 : i32
    %c0_i32_0 = arith.constant 0 : i32
    %c0_i32_1 = arith.constant 0 : i32
    return %c0_i32, %c0_i32_0 : i32, i32
  }
  func.func @transform_9(%arg0: i32) -> (i32, i32) {
    %c0_i32 = arith.constant 0 : i32
    %c0_i32_0 = arith.constant 0 : i32
    %c0_i32_1 = arith.constant 0 : i32
    return %c0_i32, %c0_i32_0 : i32, i32
  }
  func.func @transform_10(%arg0: i32) -> (i32, i32) {
    %c0_i32 = arith.constant 0 : i32
    %c0_i32_0 = arith.constant 0 : i32
    %c0_i32_1 = arith.constant 0 : i32
    return %c0_i32, %c0_i32_0 : i32, i32
  }
  func.func @transform_11(%arg0: i32) -> (i32, i32) {
    %c0_i32 = arith.constant 0 : i32
    %c0_i32_0 = arith.constant 0 : i32
    %c0_i32_1 = arith.constant 0 : i32
    return %c0_i32, %c0_i32_0 : i32, i32
  }
  func.func @transform_12(%arg0: i32) -> (i32, i32) {
    %c0_i32 = arith.constant 0 : i32
    %c0_i32_0 = arith.constant 0 : i32
    %c0_i32_1 = arith.constant 0 : i32
    return %c0_i32, %c0_i32_0 : i32, i32
  }
  func.func @transform_13(%arg0: i32) -> (i32, i32, i32) {
    %c0_i32 = arith.constant 0 : i32
    %c0_i32_0 = arith.constant 0 : i32
    %c0_i32_1 = arith.constant 0 : i32
    return %arg0, %c0_i32, %c0_i32_0 : i32, i32, i32
  }
}

</mosaic_0001>

<llo_original>
// kernel: signal_encoder.1
$region0: #{signal_encoder.1}
  #allocation0 [shape = 'u32[]', space=smem, size = 0x4, offset = 0x4, fixed_abs, tag = 'smem constant byte address 0x4 - core index']
  #allocation1 [shape = 'u32[144,128]{1,0:T(1,128)}', space=vmem, size = 0x12000, scoped, tag = 'internal scratch']
  %s0 = inlined_call_operand.vmem [shape: f32[32,1], index: 0, kind: input, shape index: {}]
  %s1 = inlined_call_operand.vmem [shape: f32[3,32], index: 1, kind: input, shape index: {}]
  %s2 = inlined_call_operand.vmem [shape: f32[1,32], index: 2, kind: input, shape index: {}]
  %s3 = inlined_call_operand.vmem [shape: f32[1,32], index: 3, kind: input, shape index: {}]
  %s4 = inlined_call_operand.vmem [shape: bf16[128,64], index: 4, kind: input, shape index: {}]
  %s5 = inlined_call_operand.vmem [shape: f32[1,64], index: 5, kind: input, shape index: {}]
  %s6 = inlined_call_operand.vmem [shape: f32[1,64], index: 6, kind: input, shape index: {}]
  %s7 = inlined_call_operand.vmem [shape: bf16[256,128], index: 7, kind: input, shape index: {}]
  %s8 = inlined_call_operand.vmem [shape: f32[1,128], index: 8, kind: input, shape index: {}]
  %s9 = inlined_call_operand.vmem [shape: f32[1,128], index: 9, kind: input, shape index: {}]
  %s10 = inlined_call_operand.vmem [shape: bf16[384,128], index: 10, kind: input, shape index: {}]
  %s11 = inlined_call_operand.vmem [shape: f32[1,128], index: 11, kind: input, shape index: {}]
  %s12 = inlined_call_operand.vmem [shape: f32[1,128], index: 12, kind: input, shape index: {}]
  %s13 = inlined_call_operand.vmem [shape: f32[2,16,64], index: 13, kind: output, shape index: {}]
  %s14 = sld [smem:[#allocation0]]
  $region85: #{signal_encoder.1} parent=0
    _
  %s16 = ssub.s32 1, %s14
  %s17 = scalar_select 0, %s16, %s14
  loop: start=0, step=1, limit=4
  $region2: #{signal_encoder.1} parent=0 // loop_pre_header
    _
  $region3: #{signal_encoder.1} parent=0 // loop_header
    %s19 = sphi 0, %s23
    %p20 = scmp.ge.s32.totalorder %s19, 4
    %s29 = sphi 0, %s31
    %s32 = sphi 0, %s29
    %s33 = sphi 0, %s32
    %s49 = sphi 0, %s33
    %s53 = sphi 0, %s53
    %s55 = sphi 0, %s53
    %s56 = sphi 0, %s55
    %s70 = sphi 0, %s56
    %s74 = sphi 0, %s74
    %s76 = sphi 0, %s74
    %s77 = sphi 0, %s76
    %s91 = sphi 0, %s77
    %s95 = sphi 0, %s95
    %s97 = sphi 0, %s95
    %s98 = sphi 0, %s97
    %s112 = sphi 0, %s98
    %s116 = sphi 0, %s116
    %s118 = sphi 0, %s116
    %s119 = sphi 0, %s118
    %s133 = sphi 0, %s119
    %s137 = sphi 0, %s137
    %s139 = sphi 0, %s137
    %s140 = sphi 0, %s139
    %s154 = sphi 0, %s140
    %s158 = sphi 0, %s158
    %s160 = sphi 0, %s158
    %s161 = sphi 0, %s160
    %s175 = sphi 0, %s161
    %s179 = sphi 0, %s179
    %s181 = sphi 0, %s179
    %s182 = sphi 0, %s181
    %s196 = sphi 0, %s182
    %s200 = sphi 0, %s200
    %s202 = sphi 0, %s200
    %s203 = sphi 0, %s202
    %s217 = sphi 0, %s203
    %s221 = sphi 0, %s221
    %s223 = sphi 0, %s221
    %s224 = sphi 0, %s223
    %s238 = sphi 0, %s224
    %s242 = sphi 0, %s242
    %s244 = sphi 0, %s242
    %s245 = sphi 0, %s244
    %s259 = sphi 0, %s245
    %s263 = sphi 0, %s263
    %s265 = sphi 0, %s263
    %s266 = sphi 0, %s265
    %s280 = sphi 0, %s266
    %s284 = sphi 0, %s284
    %s286 = sphi 0, %s284
    %s287 = sphi 0, %s286
    %s301 = sphi 0, %s287
    %s307 = sphi 0, %s309
    %s310 = sphi 0, %s307
    %s311 = sphi 0, %s310
    %s327 = sphi 0, %s311
  $region4: #{signal_encoder.1} parent=0 // loop_header_branch
    %22 = sbr.rel (%p20) target = $region8
  $region5: #{signal_encoder.1} parent=0 // loop_body
    %s24 = ssub.s32 %s19, 1
    %s25 = ssub.s32 %s19, 2
    %s26 = sadd.s32 %s19, 1
    %s27 = ssub.s32 %s19, %s26
    %p28 = scmp.eq.s32.totalorder %s27, 0
    %s30 = sadd.s32 %s29, 1
    %s31 = scalar_select %p28, %s29, %s30
    %p34 = pneg %p28
    %p35 = scmp.eq.s32.totalorder %s19, 1
    %p36 = por %p34, %p35
    %p37 = scmp.ne.s32.totalorder %s29, %s32
    %p38 = scmp.eq.s32.totalorder %s19, 0
    %p39 = por %p37, %p38
    %p40 = scmp.ne.s32.totalorder %s29, %s32
    %p41 = scmp.eq.s32.totalorder %s24, 1
    %p42 = por %p40, %p41
    %p43 = scmp.ne.s32.totalorder %s32, %s33
    %p44 = scmp.eq.s32.totalorder %s24, 0
    %p45 = por %p43, %p44
    %p46 = scmp.ne.s32.totalorder %s32, %s33
    %p47 = scmp.eq.s32.totalorder %s25, 1
    %p48 = por %p46, %p47
    %p50 = scmp.ne.s32.totalorder %s33, %s49
    %p51 = scmp.eq.s32.totalorder %s25, 0
    %p52 = por %p50, %p51
    %s54 = sadd.s32 %s53, 1
    %p57 = scmp.eq.s32.totalorder %s19, 1
    %p58 = scmp.ne.s32.totalorder %s53, %s55
    %p59 = scmp.eq.s32.totalorder %s19, 0
    %p60 = por %p58, %p59
    %p61 = scmp.ne.s32.totalorder %s53, %s55
    %p62 = scmp.eq.s32.totalorder %s24, 1
    %p63 = por %p61, %p62
    %p64 = scmp.ne.s32.totalorder %s55, %s56
    %p65 = scmp.eq.s32.totalorder %s24, 0
    %p66 = por %p64, %p65
    %p67 = scmp.ne.s32.totalorder %s55, %s56
    %p68 = scmp.eq.s32.totalorder %s25, 1
    %p69 = por %p67, %p68
    %p71 = scmp.ne.s32.totalorder %s56, %s70
    %p72 = scmp.eq.s32.totalorder %s25, 0
    %p73 = por %p71, %p72
    %s75 = sadd.s32 %s74, 1
    %p78 = scmp.eq.s32.totalorder %s19, 1
    %p79 = scmp.ne.s32.totalorder %s74, %s76
    %p80 = scmp.eq.s32.totalorder %s19, 0
    %p81 = por %p79, %p80
    %p82 = scmp.ne.s32.totalorder %s74, %s76
    %p83 = scmp.eq.s32.totalorder %s24, 1
    %p84 = por %p82, %p83
    %p85 = scmp.ne.s32.totalorder %s76, %s77
    %p86 = scmp.eq.s32.totalorder %s24, 0
    %p87 = por %p85, %p86
    %p88 = scmp.ne.s32.totalorder %s76, %s77
    %p89 = scmp.eq.s32.totalorder %s25, 1
    %p90 = por %p88, %p89
    %p92 = scmp.ne.s32.totalorder %s77, %s91
    %p93 = scmp.eq.s32.totalorder %s25, 0
    %p94 = por %p92, %p93
    %s96 = sadd.s32 %s95, 1
    %p99 = scmp.eq.s32.totalorder %s19, 1
    %p100 = scmp.ne.s32.totalorder %s95, %s97
    %p101 = scmp.eq.s32.totalorder %s19, 0
    %p102 = por %p100, %p101
    %p103 = scmp.ne.s32.totalorder %s95, %s97
    %p104 = scmp.eq.s32.totalorder %s24, 1
    %p105 = por %p103, %p104
    %p106 = scmp.ne.s32.totalorder %s97, %s98
    %p107 = scmp.eq.s32.totalorder %s24, 0
    %p108 = por %p106, %p107
    %p109 = scmp.ne.s32.totalorder %s97, %s98
    %p110 = scmp.eq.s32.totalorder %s25, 1
    %p111 = por %p109, %p110
    %p113 = scmp.ne.s32.totalorder %s98, %s112
    %p114 = scmp.eq.s32.totalorder %s25, 0
    %p115 = por %p113, %p114
    %s117 = sadd.s32 %s116, 1
    %p120 = scmp.eq.s32.totalorder %s19, 1
    %p121 = scmp.ne.s32.totalorder %s116, %s118
    %p122 = scmp.eq.s32.totalorder %s19, 0
    %p123 = por %p121, %p122
    %p124 = scmp.ne.s32.totalorder %s116, %s118
    %p125 = scmp.eq.s32.totalorder %s24, 1
    %p126 = por %p124, %p125
    %p127 = scmp.ne.s32.totalorder %s118, %s119
    %p128 = scmp.eq.s32.totalorder %s24, 0
    %p129 = por %p127, %p128
    %p130 = scmp.ne.s32.totalorder %s118, %s119
    %p131 = scmp.eq.s32.totalorder %s25, 1
    %p132 = por %p130, %p131
    %p134 = scmp.ne.s32.totalorder %s119, %s133
    %p135 = scmp.eq.s32.totalorder %s25, 0
    %p136 = por %p134, %p135
    %s138 = sadd.s32 %s137, 1
    %p141 = scmp.eq.s32.totalorder %s19, 1
    %p142 = scmp.ne.s32.totalorder %s137, %s139
    %p143 = scmp.eq.s32.totalorder %s19, 0
    %p144 = por %p142, %p143
    %p145 = scmp.ne.s32.totalorder %s137, %s139
    %p146 = scmp.eq.s32.totalorder %s24, 1
    %p147 = por %p145, %p146
    %p148 = scmp.ne.s32.totalorder %s139, %s140
    %p149 = scmp.eq.s32.totalorder %s24, 0
    %p150 = por %p148, %p149
    %p151 = scmp.ne.s32.totalorder %s139, %s140
    %p152 = scmp.eq.s32.totalorder %s25, 1
    %p153 = por %p151, %p152
    %p155 = scmp.ne.s32.totalorder %s140, %s154
    %p156 = scmp.eq.s32.totalorder %s25, 0
    %p157 = por %p155, %p156
    %s159 = sadd.s32 %s158, 1
    %p162 = scmp.eq.s32.totalorder %s19, 1
    %p163 = scmp.ne.s32.totalorder %s158, %s160
    %p164 = scmp.eq.s32.totalorder %s19, 0
    %p165 = por %p163, %p164
    %p166 = scmp.ne.s32.totalorder %s158, %s160
    %p167 = scmp.eq.s32.totalorder %s24, 1
    %p168 = por %p166, %p167
    %p169 = scmp.ne.s32.totalorder %s160, %s161
    %p170 = scmp.eq.s32.totalorder %s24, 0
    %p171 = por %p169, %p170
    %p172 = scmp.ne.s32.totalorder %s160, %s161
    %p173 = scmp.eq.s32.totalorder %s25, 1
    %p174 = por %p172, %p173
    %p176 = scmp.ne.s32.totalorder %s161, %s175
    %p177 = scmp.eq.s32.totalorder %s25, 0
    %p178 = por %p176, %p177
    %s180 = sadd.s32 %s179, 1
    %p183 = scmp.eq.s32.totalorder %s19, 1
    %p184 = scmp.ne.s32.totalorder %s179, %s181
    %p185 = scmp.eq.s32.totalorder %s19, 0
    %p186 = por %p184, %p185
    %p187 = scmp.ne.s32.totalorder %s179, %s181
    %p188 = scmp.eq.s32.totalorder %s24, 1
    %p189 = por %p187, %p188
    %p190 = scmp.ne.s32.totalorder %s181, %s182
    %p191 = scmp.eq.s32.totalorder %s24, 0
    %p192 = por %p190, %p191
    %p193 = scmp.ne.s32.totalorder %s181, %s182
    %p194 = scmp.eq.s32.totalorder %s25, 1
    %p195 = por %p193, %p194
    %p197 = scmp.ne.s32.totalorder %s182, %s196
    %p198 = scmp.eq.s32.totalorder %s25, 0
    %p199 = por %p197, %p198
    %s201 = sadd.s32 %s200, 1
    %p204 = scmp.eq.s32.totalorder %s19, 1
    %p205 = scmp.ne.s32.totalorder %s200, %s202
    %p206 = scmp.eq.s32.totalorder %s19, 0
    %p207 = por %p205, %p206
    %p208 = scmp.ne.s32.totalorder %s200, %s202
    %p209 = scmp.eq.s32.totalorder %s24, 1
    %p210 = por %p208, %p209
    %p211 = scmp.ne.s32.totalorder %s202, %s203
    %p212 = scmp.eq.s32.totalorder %s24, 0
    %p213 = por %p211, %p212
    %p214 = scmp.ne.s32.totalorder %s202, %s203
    %p215 = scmp.eq.s32.totalorder %s25, 1
    %p216 = por %p214, %p215
    %p218 = scmp.ne.s32.totalorder %s203, %s217
    %p219 = scmp.eq.s32.totalorder %s25, 0
    %p220 = por %p218, %p219
    %s222 = sadd.s32 %s221, 1
    %p225 = scmp.eq.s32.totalorder %s19, 1
    %p226 = scmp.ne.s32.totalorder %s221, %s223
    %p227 = scmp.eq.s32.totalorder %s19, 0
    %p228 = por %p226, %p227
    %p229 = scmp.ne.s32.totalorder %s221, %s223
    %p230 = scmp.eq.s32.totalorder %s24, 1
    %p231 = por %p229, %p230
    %p232 = scmp.ne.s32.totalorder %s223, %s224
    %p233 = scmp.eq.s32.totalorder %s24, 0
    %p234 = por %p232, %p233
    %p235 = scmp.ne.s32.totalorder %s223, %s224
    %p236 = scmp.eq.s32.totalorder %s25, 1
    %p237 = por %p235, %p236
    %p239 = scmp.ne.s32.totalorder %s224, %s238
    %p240 = scmp.eq.s32.totalorder %s25, 0
    %p241 = por %p239, %p240
    %s243 = sadd.s32 %s242, 1
    %p246 = scmp.eq.s32.totalorder %s19, 1
    %p247 = scmp.ne.s32.totalorder %s242, %s244
    %p248 = scmp.eq.s32.totalorder %s19, 0
    %p249 = por %p247, %p248
    %p250 = scmp.ne.s32.totalorder %s242, %s244
    %p251 = scmp.eq.s32.totalorder %s24, 1
    %p252 = por %p250, %p251
    %p253 = scmp.ne.s32.totalorder %s244, %s245
    %p254 = scmp.eq.s32.totalorder %s24, 0
    %p255 = por %p253, %p254
    %p256 = scmp.ne.s32.totalorder %s244, %s245
    %p257 = scmp.eq.s32.totalorder %s25, 1
    %p258 = por %p256, %p257
    %p260 = scmp.ne.s32.totalorder %s245, %s259
    %p261 = scmp.eq.s32.totalorder %s25, 0
    %p262 = por %p260, %p261
    %s264 = sadd.s32 %s263, 1
    %p267 = scmp.eq.s32.totalorder %s19, 1
    %p268 = scmp.ne.s32.totalorder %s263, %s265
    %p269 = scmp.eq.s32.totalorder %s19, 0
    %p270 = por %p268, %p269
    %p271 = scmp.ne.s32.totalorder %s263, %s265
    %p272 = scmp.eq.s32.totalorder %s24, 1
    %p273 = por %p271, %p272
    %p274 = scmp.ne.s32.totalorder %s265, %s266
    %p275 = scmp.eq.s32.totalorder %s24, 0
    %p276 = por %p274, %p275
    %p277 = scmp.ne.s32.totalorder %s265, %s266
    %p278 = scmp.eq.s32.totalorder %s25, 1
    %p279 = por %p277, %p278
    %p281 = scmp.ne.s32.totalorder %s266, %s280
    %p282 = scmp.eq.s32.totalorder %s25, 0
    %p283 = por %p281, %p282
    %s285 = sadd.s32 %s284, 1
    %p288 = scmp.eq.s32.totalorder %s19, 1
    %p289 = scmp.ne.s32.totalorder %s284, %s286
    %p290 = scmp.eq.s32.totalorder %s19, 0
    %p291 = por %p289, %p290
    %p292 = scmp.ne.s32.totalorder %s284, %s286
    %p293 = scmp.eq.s32.totalorder %s24, 1
    %p294 = por %p292, %p293
    %p295 = scmp.ne.s32.totalorder %s286, %s287
    %p296 = scmp.eq.s32.totalorder %s24, 0
    %p297 = por %p295, %p296
    %p298 = scmp.ne.s32.totalorder %s286, %s287
    %p299 = scmp.eq.s32.totalorder %s25, 1
    %p300 = por %p298, %p299
    %p302 = scmp.ne.s32.totalorder %s287, %s301
    %p303 = scmp.eq.s32.totalorder %s25, 0
    %p304 = por %p302, %p303
    %s305 = ssub.s32 %s19, %s26
    %p306 = scmp.eq.s32.totalorder %s305, 0
    %s308 = sadd.s32 %s307, 1
    %s309 = scalar_select %p306, %s307, %s308
    %p312 = pneg %p306
    %p313 = scmp.eq.s32.totalorder %s19, 1
    %p314 = por %p312, %p313
    %p315 = scmp.ne.s32.totalorder %s307, %s310
    %p316 = scmp.eq.s32.totalorder %s19, 0
    %p317 = por %p315, %p316
    %p318 = scmp.ne.s32.totalorder %s307, %s310
    %p319 = scmp.eq.s32.totalorder %s24, 1
    %p320 = por %p318, %p319
    %p321 = scmp.ne.s32.totalorder %s310, %s311
    %p322 = scmp.eq.s32.totalorder %s24, 0
    %p323 = por %p321, %p322
    %p324 = scmp.ne.s32.totalorder %s310, %s311
    %p325 = scmp.eq.s32.totalorder %s25, 1
    %p326 = por %p324, %p325
    %p328 = scmp.ne.s32.totalorder %s311, %s327
    %p329 = scmp.eq.s32.totalorder %s25, 0
    %p330 = por %p328, %p329
    %p331 = scmp.le.s32.totalorder 1, %s19
    %p332 = scmp.lt.s32.totalorder %s19, 3
    %p333 = pnand %p331, %p332
    %p334 = pneg %p333
    // Predicated region
    $region9: #{signal_encoder.1} parent=5 // pred_check
      _
    $region10: #{signal_encoder.1} parent=5 // pred_check_branch
      %336 = sbr.rel (%p333) target = $region12
    $region11: #{signal_encoder.1} parent=5 // pred_region
      %s337 = ssub.s32 %s19, 1
      // Predicated region
      $region13: #{signal_encoder.1} parent=11 // pred_check
        %p338 = pneg %p66
      $region14: #{signal_encoder.1} parent=11 // pred_check_branch
        %340 = sbr.rel (%p338) target = $region16
      $region15: #{signal_encoder.1} parent=11 // pred_region
        _
      $region16: #{signal_encoder.1} parent=11 // pred_fallthru
        _
      // Predicated region
      $region17: #{signal_encoder.1} parent=11 // pred_check
        %p341 = pneg %p87
      $region18: #{signal_encoder.1} parent=11 // pred_check_branch
        %343 = sbr.rel (%p341) target = $region20
      $region19: #{signal_encoder.1} parent=11 // pred_region
        _
      $region20: #{signal_encoder.1} parent=11 // pred_fallthru
        _
      // Predicated region
      $region21: #{signal_encoder.1} parent=11 // pred_check
        %p344 = pneg %p108
      $region22: #{signal_encoder.1} parent=11 // pred_check_branch
        %346 = sbr.rel (%p344) target = $region24
      $region23: #{signal_encoder.1} parent=11 // pred_region
        _
      $region24: #{signal_encoder.1} parent=11 // pred_fallthru
        _
      // Predicated region
      $region25: #{signal_encoder.1} parent=11 // pred_check
        %p347 = pneg %p129
      $region26: #{signal_encoder.1} parent=11 // pred_check_branch
        %349 = sbr.rel (%p347) target = $region28
      $region27: #{signal_encoder.1} parent=11 // pred_region
        _
      $region28: #{signal_encoder.1} parent=11 // pred_fallthru
        _
      // Predicated region
      $region29: #{signal_encoder.1} parent=11 // pred_check
        %p350 = pneg %p150
      $region30: #{signal_encoder.1} parent=11 // pred_check_branch
        %352 = sbr.rel (%p350) target = $region32
      $region31: #{signal_encoder.1} parent=11 // pred_region
        _
      $region32: #{signal_encoder.1} parent=11 // pred_fallthru
        _
      // Predicated region
      $region33: #{signal_encoder.1} parent=11 // pred_check
        %p353 = pneg %p171
      $region34: #{signal_encoder.1} parent=11 // pred_check_branch
        %355 = sbr.rel (%p353) target = $region36
      $region35: #{signal_encoder.1} parent=11 // pred_region
        _
      $region36: #{signal_encoder.1} parent=11 // pred_fallthru
        _
      // Predicated region
      $region37: #{signal_encoder.1} parent=11 // pred_check
        %p356 = pneg %p192
      $region38: #{signal_encoder.1} parent=11 // pred_check_branch
        %358 = sbr.rel (%p356) target = $region40
      $region39: #{signal_encoder.1} parent=11 // pred_region
        _
      $region40: #{signal_encoder.1} parent=11 // pred_fallthru
        _
      // Predicated region
      $region41: #{signal_encoder.1} parent=11 // pred_check
        %p359 = pneg %p213
      $region42: #{signal_encoder.1} parent=11 // pred_check_branch
        %361 = sbr.rel (%p359) target = $region44
      $region43: #{signal_encoder.1} parent=11 // pred_region
        _
      $region44: #{signal_encoder.1} parent=11 // pred_fallthru
        _
      // Predicated region
      $region45: #{signal_encoder.1} parent=11 // pred_check
        %p362 = pneg %p234
      $region46: #{signal_encoder.1} parent=11 // pred_check_branch
        %364 = sbr.rel (%p362) target = $region48
      $region47: #{signal_encoder.1} parent=11 // pred_region
        _
      $region48: #{signal_encoder.1} parent=11 // pred_fallthru
        _
      // Predicated region
      $region49: #{signal_encoder.1} parent=11 // pred_check
        %p365 = pneg %p255
      $region50: #{signal_encoder.1} parent=11 // pred_check_branch
        %367 = sbr.rel (%p365) target = $region52
      $region51: #{signal_encoder.1} parent=11 // pred_region
        _
      $region52: #{signal_encoder.1} parent=11 // pred_fallthru
        _
      // Predicated region
      $region53: #{signal_encoder.1} parent=11 // pred_check
        %p368 = pneg %p276
      $region54: #{signal_encoder.1} parent=11 // pred_check_branch
        %370 = sbr.rel (%p368) target = $region56
      $region55: #{signal_encoder.1} parent=11 // pred_region
        _
      $region56: #{signal_encoder.1} parent=11 // pred_fallthru
        _
      // Predicated region
      $region57: #{signal_encoder.1} parent=11 // pred_check
        %p371 = pneg %p297
      $region58: #{signal_encoder.1} parent=11 // pred_check_branch
        %373 = sbr.rel (%p371) target = $region60
      $region59: #{signal_encoder.1} parent=11 // pred_region
        _
      $region60: #{signal_encoder.1} parent=11 // pred_fallthru
        _
    $region12: #{signal_encoder.1} parent=5 // pred_fallthru
      _
    %p374 = scmp.lt.s32.totalorder %s19, 2
    // Predicated region
    $region61: #{signal_encoder.1} parent=5 // pred_check
      %p375 = pneg %p374
    $region62: #{signal_encoder.1} parent=5 // pred_check_branch
      %377 = sbr.rel (%p375) target = $region64
    $region63: #{signal_encoder.1} parent=5 // pred_region
      // Predicated region
      $region65: #{signal_encoder.1} parent=63 // pred_check
        %p378 = pneg %p39
      $region66: #{signal_encoder.1} parent=63 // pred_check_branch
        %380 = sbr.rel (%p378) target = $region68
      $region67: #{signal_encoder.1} parent=63 // pred_region
        %s381 = smul.u32 2, %s19
        %p382 = scmp.lt.s32.totalorder %s381, 3
        %s383 = scalar_select %p382, %s381, 3
        %s384 = smul.addr %s383, 8
        %s385 = scalar_lea.vmem %s0, %s384
        %s386 = smul.u32 2, %s19
      $region68: #{signal_encoder.1} parent=63 // pred_fallthru
        _
    $region64: #{signal_encoder.1} parent=5 // pred_fallthru
      _
    %p387 = scmp.le.s32.totalorder 1, %s19
    %p388 = scmp.lt.s32.totalorder %s19, 3
    %p389 = pnand %p387, %p388
    %p390 = pneg %p389
    // Predicated region
    $region69: #{signal_encoder.1} parent=5 // pred_check
      _
    $region70: #{signal_encoder.1} parent=5 // pred_check_branch
      %392 = sbr.rel (%p389) target = $region72
    $region71: #{signal_encoder.1} parent=5 // pred_region
      %s393 = ssub.s32 %s19, 1
      %s394 = smul.u32 2, %s24
      %p395 = scmp.lt.s32.totalorder %s394, 3
      %s396 = scalar_select %p395, %s394, 3
      %s397 = smul.addr %s396, 8
      %s398 = scalar_lea.vmem %s0, %s397
      %p399 = pneg %p45
      %p400 = pneg %p42
      %p401 = pneg %p66
      %p402 = pneg %p63
      %p403 = pneg %p87
      %p404 = pneg %p84
      %p405 = pneg %p108
      %p406 = pneg %p105
      %p407 = pneg %p129
      %p408 = pneg %p126
      %p409 = pneg %p150
      %p410 = pneg %p147
      %p411 = pneg %p171
      %p412 = pneg %p168
      %p413 = pneg %p192
      %p414 = pneg %p189
      %p415 = pneg %p213
      %p416 = pneg %p210
      %p417 = pneg %p234
      %p418 = pneg %p231
      %p419 = pneg %p255
      %p420 = pneg %p252
      %p421 = pneg %p276
      %p422 = pneg %p273
      %p423 = pneg %p297
      %p424 = pneg %p294
      %p425 = pneg %p323
      %p426 = pneg %p320
      %p427 = scmp.lt.s32.totalorder %s24, 1
      %s428 = scalar_select %p427, %s24, 1
      %s429 = smul.addr %s428, 2
      %s430 = smul.addr %s429, 8
      %s431 = scalar_lea.vmem %s13, %s430
      %s432 = smul.u32 2, %s24
      %p433 = scmp.lt.s32.totalorder %s432, 3
      %s434 = scalar_select %p433, %s432, 3
      %s435 = smul.addr %s434, 8
      %s436 = scalar_lea.vmem %s0, %s435
      %s437 = smul.u32 2, %s24
      %p438 = scmp.lt.s32.totalorder %s24, 1
      %s439 = scalar_select %p438, %s24, 1
      %s440 = smul.addr %s439, 2
      %s441 = smul.addr %s440, 8
      %s442 = scalar_lea.vmem %s13, %s441
      %v444 = vlaneseq
      %v445 = vshrl.u32 %v444, 7
      %v446 = vadd.s32 %v445, 8
      %vm447 = vcmp.ge.s32.totalorder %v445, 1
      %vm448 = vcmp.ge.s32.totalorder %v446, 1
      %v449 = vld [vmem:[%s436] sm:$0xff]
      %v450 = vld [vmem:[%s436 + $0x8] sm:$0xff]
      %v451 = vrot.slane %v449, 7
      %v452 = vrot.slane %v450, 7
      %vm453 = vcmp.lt.s32.totalorder %v445, 1
      %v454 = vsel %vm453, %v451, %v452
      %v455 = vsel %vm453, %v452, %v451
      %v456 = vsel %vm447, %v455, 0.0
      %v457 = vsel %vm448, %v454, 0.0
      %v458 = vld [vmem:[%s1] sm:$0x1]
      %460 = vset.pattern.permute.xlu0 0
      %461 = vperm.xlu0 %460, %v456
      %v462 = vpop.permute.xlu0 %461
      %465 = vset.pattern.permute.xlu0 0
      %466 = vperm.xlu0 %465, %v457
      %v467 = vpop.permute.xlu0 %466
      %v469 = vlaneseq
      %v470 = vshrl.u32 %v469, 7
      %v471 = vsub.s32 0, %v470
      %v472 = vrot.slane %v458, %v471
      %v473 = vmul.f32 %v462, %v472
      %v474 = vmul.f32 %v467, %v472
      %v475 = vld [vmem:[%s1 + $0x1] sm:$0x1]
      %477 = vset.pattern.permute.xlu0 0
      %478 = vperm.xlu0 %477, %v449
      %v479 = vpop.permute.xlu0 %478
      %482 = vset.pattern.permute.xlu0 0
      %483 = vperm.xlu0 %482, %v450
      %v484 = vpop.permute.xlu0 %483
      %v486 = vlaneseq
      %v487 = vshrl.u32 %v486, 7
      %v488 = vsub.s32 0, %v487
      %v489 = vrot.slane %v475, %v488
      %v490 = vmul.f32 %v479, %v489
      %v491 = vmul.f32 %v484, %v489
      %v492 = vadd.f32 %v473, %v490
      %v493 = vadd.f32 %v474, %v491
      %vm494 = vcmp.lt.s32.totalorder %v445, 15
      %vm495 = vcmp.lt.s32.totalorder %v446, 15
      %v496 = vrot.slane %v449, 1
      %v497 = vrot.slane %v450, 1
      %vm498 = vcmp.lt.s32.totalorder %v445, 7
      %v499 = vsel %vm498, %v496, %v497
      %v500 = vsel %vm498, %v497, %v496
      %v501 = vsel %vm494, %v499, 0.0
      %v502 = vsel %vm495, %v500, 0.0
      %v503 = vld [vmem:[%s1 + $0x2] sm:$0x1]
      %505 = vset.pattern.permute.xlu0 0
      %506 = vperm.xlu0 %505, %v501
      %v507 = vpop.permute.xlu0 %506
      %510 = vset.pattern.permute.xlu0 0
      %511 = vperm.xlu0 %510, %v502
      %v512 = vpop.permute.xlu0 %511
      %v514 = vlaneseq
      %v515 = vshrl.u32 %v514, 7
      %v516 = vsub.s32 0, %v515
      %v517 = vrot.slane %v503, %v516
      %v518 = vmul.f32 %v507, %v517
      %v519 = vmul.f32 %v512, %v517
      %v520 = vadd.f32 %v492, %v518
      %v521 = vadd.f32 %v493, %v519
      %v522 = vld [vmem:[%s2] sm:$0x1]
      %v524 = vlaneseq
      %v525 = vshrl.u32 %v524, 7
      %v526 = vsub.s32 0, %v525
      %v527 = vrot.slane %v522, %v526
      %v529 = vmul.f32 %v520, %v527
      %v530 = vmul.f32 %v521, %v527
      %v531 = vld [vmem:[%s3] sm:$0x1]
      %v533 = vlaneseq
      %v534 = vshrl.u32 %v533, 7
      %v535 = vsub.s32 0, %v534
      %v536 = vrot.slane %v531, %v535
      %v538 = vadd.f32 %v529, %v536
      %v539 = vadd.f32 %v530, %v536
      %vm540 = vcmp.gt.f32.partialorder %v538, 0.0
      %vm541 = vcmp.gt.f32.partialorder %v539, 0.0
      %v542 = vmul.f32 %v538, 0.01
      %v543 = vmul.f32 %v539, 0.01
      %v544 = vsel %vm540, %v538, %v542
      %v545 = vsel %vm541, %v539, %v543
      %v546 = vrot.slane %v544, 1
      %v547 = vrot.slane %v545, 1
      %v548 = vsel %vm498, %v546, %v547
      %v549 = vsel %vm498, %v547, %v546
      %v550 = vmax.f32 %v544, %v548
      %v551 = vmax.f32 %v545, %v549
      %v552 = vrot.slane %v550, 7
      %v553 = vrot.slane %v551, 7
      %v554 = vsel %vm453, %v552, %v553
      %v555 = vsel %vm453, %v553, %v552
      %v556 = vsel %vm447, 1, 0
      %v557 = vsel %vm448, 1, 0
      %vm558 = vcmp.eq.s32.totalorder %v556, 1
      %vm559 = vcmp.eq.s32.totalorder %v557, 1
      %v560 = vsel %vm558, %v555, 0.0
      %v561 = vsel %vm559, %v554, 0.0
      %vm562 = vcmp.lt.s32.totalorder %v445, 14
      %vm563 = vcmp.lt.s32.totalorder %v446, 14
      %v564 = vrot.slane %v550, 1
      %v565 = vrot.slane %v551, 1
      %v566 = vsel %vm498, %v564, %v565
      %v567 = vsel %vm498, %v565, %v564
      %v568 = vsel %vm562, 1, 0
      %v569 = vsel %vm563, 1, 0
      %vm570 = vcmp.eq.s32.totalorder %v568, 1
      %vm571 = vcmp.eq.s32.totalorder %v569, 1
      %v572 = vsel %vm570, %v566, 0.0
      %v573 = vsel %vm571, %v567, 0.0
      %576 = vrot.lane.b32.xlu0 %v550, 32
      %v577 = vpop.permute.xlu0 %576
      %578 = vrot.lane.b32.xlu0 %v551, 32
      %v579 = vpop.permute.xlu0 %578
      %584 = vrot.lane.b32.xlu0 %v572, 64
      %v585 = vpop.permute.xlu0 %584
      %586 = vrot.lane.b32.xlu0 %v573, 64
      %v587 = vpop.permute.xlu0 %586
      %vm590 = vcmask 261120
      %v591 = vsel %vm590, %v560, %v577
      %v592 = vsel %vm590, %v561, %v579
      %vm593 = vcmask 523264
      %v594 = vsel %vm593, %v591, %v585
      %v595 = vsel %vm593, %v592, %v587
      %vm596 = vcmask 785408
      %v597 = vsel %vm596, %v594, 0.0
      %v598 = vsel %vm596, %v595, 0.0
      %v599 = vpack.c.bf16 %v598, %v597
      %v600 = vld [vmem:[%s4] sm:$0xf]
      %v601 = vld [vmem:[%s4 + $0x4] sm:$0xf]
      %v602 = vld [vmem:[%s4 + $0x8] sm:$0xf]
      %v603 = vld [vmem:[%s4 + $0xc] sm:$0xf]
      %v604 = vld [vmem:[%s4 + $0x10] sm:$0xf]
      %v605 = vld [vmem:[%s4 + $0x14] sm:$0xf]
      %v606 = vld [vmem:[%s4 + $0x18] sm:$0xf]
      %v607 = vld [vmem:[%s4 + $0x1c] sm:$0xf]
      %v608 = vld [vmem:[%s4 + $0x20] sm:$0xf]
      %v609 = vld [vmem:[%s4 + $0x24] sm:$0xf]
      %v610 = vld [vmem:[%s4 + $0x28] sm:$0xf]
      %v611 = vld [vmem:[%s4 + $0x2c] sm:$0xf]
      %v612 = vld [vmem:[%s4 + $0x30] sm:$0xf]
      %v613 = vld [vmem:[%s4 + $0x34] sm:$0xf]
      %v614 = vld [vmem:[%s4 + $0x38] sm:$0xf]
      %v615 = vld [vmem:[%s4 + $0x3c] sm:$0xf]
      %v632 = vunpack.c.l.b16 %v600
      %v633 = vunpack.c.l.b16 %v601
      %v634 = vunpack.c.l.b16 %v602
      %v635 = vunpack.c.l.b16 %v603
      %v636 = vunpack.c.l.b16 %v604
      %v637 = vunpack.c.l.b16 %v605
      %v638 = vunpack.c.l.b16 %v606
      %v639 = vunpack.c.l.b16 %v607
      %v640 = vunpack.c.l.b16 %v608
      %v641 = vunpack.c.l.b16 %v609
      %v642 = vunpack.c.l.b16 %v610
      %v643 = vunpack.c.l.b16 %v611
      %v644 = vunpack.c.l.b16 %v612
      %v645 = vunpack.c.l.b16 %v613
      %v646 = vunpack.c.l.b16 %v614
      %v647 = vunpack.c.l.b16 %v615
      %v648 = vpack.c.b16 %v633, %v632
      %v649 = vpack.c.b16 %v635, %v634
      %v650 = vpack.c.b16 %v637, %v636
      %v651 = vpack.c.b16 %v639, %v638
      %v652 = vpack.c.b16 %v641, %v640
      %v653 = vpack.c.b16 %v643, %v642
      %v654 = vpack.c.b16 %v645, %v644
      %v655 = vpack.c.b16 %v647, %v646
      %664 = vmatprep.subr.bf16.mxu0 0
      %665 = vmatpush1.bf16.msra.mxu0 %v648
      %666 = vmatprep.subr.bf16.mxu0 0
      %667 = vmatpush1.bf16.msra.mxu0 %v649
      %668 = vmatprep.subr.bf16.mxu0 0
      %669 = vmatpush1.bf16.msra.mxu0 %v650
      %670 = vmatprep.subr.bf16.mxu0 0
      %671 = vmatpush1.bf16.msra.mxu0 %v651
      %672 = vmatprep.subr.bf16.mxu0 0
      %673 = vmatpush1.bf16.msra.mxu0 %v652
      %674 = vmatprep.subr.bf16.mxu0 0
      %675 = vmatpush1.bf16.msra.mxu0 %v653
      %676 = vmatprep.subr.bf16.mxu0 0
      %677 = vmatpush1.bf16.msra.mxu0 %v654
      %678 = vmatprep.subr.bf16.mxu0 0
      %679 = vmatpush1.bf16.msra.mxu0 %v655
      %680 = vmatprep.subr.bf16.mxu0 0
      %681 = vmatpush1.bf16.msra.mxu0 0
      %682 = vmatprep.subr.bf16.mxu0 0
      %683 = vmatpush1.bf16.msra.mxu0 0
      %684 = vmatprep.subr.bf16.mxu0 0
      %685 = vmatpush1.bf16.msra.mxu0 0
      %686 = vmatprep.subr.bf16.mxu0 0
      %687 = vmatpush1.bf16.msra.mxu0 0
      %688 = vmatprep.subr.bf16.mxu0 0
      %689 = vmatpush1.bf16.msra.mxu0 0
      %690 = vmatprep.subr.bf16.mxu0 0
      %691 = vmatpush1.bf16.msra.mxu0 0
      %692 = vmatprep.subr.bf16.mxu0 0
      %693 = vmatpush1.bf16.msra.mxu0 0
      %694 = vmatprep.subr.bf16.mxu0 0
      %695 = vmatpush1.bf16.msra.mxu0 0
      %696 = vmatprep.mubr.bf16.mxu0 0
      %697 = vmatmul.mubr.bf16.gmra.mrb[0].mxu0 %v599
      %v698 = vpop.f32.mrb[0].mxu0
      %v699 = vadd.f32 0.0, %v698
      %v700 = vpop.f32.mrb[0].mxu0
      %v701 = vpop.f32.mrb[0].mxu0
      %v702 = vadd.f32 0.0, %v701
      %v703 = vpop.f32.mrb[0].mxu0
      %704 = vdwg.mxu0
      %v705 = vld [vmem:[%s5] sm:$0x1]
      %v707 = vlaneseq
      %v708 = vshrl.u32 %v707, 7
      %v709 = vsub.s32 0, %v708
      %v710 = vrot.slane %v705, %v709
      %v712 = vmul.f32 %v699, %v710
      %v713 = vmul.f32 %v702, %v710
      %v714 = vld [vmem:[%s6] sm:$0x1]
      %v716 = vlaneseq
      %v717 = vshrl.u32 %v716, 7
      %v718 = vsub.s32 0, %v717
      %v719 = vrot.slane %v714, %v718
      %v721 = vadd.f32 %v712, %v719
      %v722 = vadd.f32 %v713, %v719
      %vm723 = vcmp.gt.f32.partialorder %v721, 0.0
      %vm724 = vcmp.gt.f32.partialorder %v722, 0.0
      %v725 = vmul.f32 %v721, 0.01
      %v726 = vmul.f32 %v722, 0.01
      %v727 = vsel %vm723, %v721, %v725
      %v728 = vsel %vm724, %v722, %v726
      %v729 = vrot.slane %v727, 1
      %v730 = vrot.slane %v728, 1
      %v731 = vsel %vm498, %v729, %v730
      %v732 = vsel %vm498, %v730, %v729
      %v733 = vmax.f32 %v727, %v731
      %v734 = vmax.f32 %v728, %v732
      %v735 = vrot.slane %v733, 7
      %v736 = vrot.slane %v734, 7
      %v737 = vsel %vm453, %v735, %v736
      %v738 = vsel %vm453, %v736, %v735
      %v739 = vsel %vm558, %v738, 0.0
      %v740 = vsel %vm559, %v737, 0.0
      %vm741 = vcmp.lt.s32.totalorder %v445, 13
      %vm742 = vcmp.lt.s32.totalorder %v446, 13
      %v743 = vrot.slane %v733, 1
      %v744 = vrot.slane %v734, 1
      %v745 = vsel %vm498, %v743, %v744
      %v746 = vsel %vm498, %v744, %v743
      %v747 = vsel %vm741, 1, 0
      %v748 = vsel %vm742, 1, 0
      %vm749 = vcmp.eq.s32.totalorder %v747, 1
      %vm750 = vcmp.eq.s32.totalorder %v748, 1
      %v751 = vsel %vm749, %v745, 0.0
      %v752 = vsel %vm750, %v746, 0.0
      %755 = vrot.lane.b32.xlu0 %v733, 64
      %v756 = vpop.permute.xlu0 %755
      %757 = vrot.lane.b32.xlu0 %v734, 64
      %v758 = vpop.permute.xlu0 %757
      %v761 = vsel %vm593, %v739, %v756
      %v762 = vsel %vm593, %v740, %v758
      %v763 = vsel %vm593, %v751, 0.0
      %v764 = vsel %vm593, %v752, 0.0
      %v765 = vpack.c.bf16 %v762, %v761
      %v766 = vpack.c.bf16 %v764, %v763
      %v767 = vld [vmem:[%s7] sm:$0xf]
      %v768 = vld [vmem:[%s7 + $0x4] sm:$0xf]
      %v769 = vld [vmem:[%s7 + $0x8] sm:$0xf]
      %v770 = vld [vmem:[%s7 + $0xc] sm:$0xf]
      %v771 = vld [vmem:[%s7 + $0x10] sm:$0xf]
      %v772 = vld [vmem:[%s7 + $0x14] sm:$0xf]
      %v773 = vld [vmem:[%s7 + $0x18] sm:$0xf]
      %v774 = vld [vmem:[%s7 + $0x1c] sm:$0xf]
      %v775 = vld [vmem:[%s7 + $0x20] sm:$0xf]
      %v776 = vld [vmem:[%s7 + $0x24] sm:$0xf]
      %v777 = vld [vmem:[%s7 + $0x28] sm:$0xf]
      %v778 = vld [vmem:[%s7 + $0x2c] sm:$0xf]
      %v779 = vld [vmem:[%s7 + $0x30] sm:$0xf]
      %v780 = vld [vmem:[%s7 + $0x34] sm:$0xf]
      %v781 = vld [vmem:[%s7 + $0x38] sm:$0xf]
      %v782 = vld [vmem:[%s7 + $0x3c] sm:$0xf]
      %v783 = vld [vmem:[%s7 + $0x40] sm:$0xf]
      %v784 = vld [vmem:[%s7 + $0x44] sm:$0xf]
      %v785 = vld [vmem:[%s7 + $0x48] sm:$0xf]
      %v786 = vld [vmem:[%s7 + $0x4c] sm:$0xf]
      %v787 = vld [vmem:[%s7 + $0x50] sm:$0xf]
      %v788 = vld [vmem:[%s7 + $0x54] sm:$0xf]
      %v789 = vld [vmem:[%s7 + $0x58] sm:$0xf]
      %v790 = vld [vmem:[%s7 + $0x5c] sm:$0xf]
      %v791 = vld [vmem:[%s7 + $0x60] sm:$0xf]
      %v792 = vld [vmem:[%s7 + $0x64] sm:$0xf]
      %v793 = vld [vmem:[%s7 + $0x68] sm:$0xf]
      %v794 = vld [vmem:[%s7 + $0x6c] sm:$0xf]
      %v795 = vld [vmem:[%s7 + $0x70] sm:$0xf]
      %v796 = vld [vmem:[%s7 + $0x74] sm:$0xf]
      %v797 = vld [vmem:[%s7 + $0x78] sm:$0xf]
      %v798 = vld [vmem:[%s7 + $0x7c] sm:$0xf]
      %v831 = vunpack.c.l.b16 %v767
      %v832 = vunpack.c.l.b16 %v768
      %v833 = vunpack.c.l.b16 %v769
      %v834 = vunpack.c.l.b16 %v770
      %v835 = vunpack.c.l.b16 %v771
      %v836 = vunpack.c.l.b16 %v772
      %v837 = vunpack.c.l.b16 %v773
      %v838 = vunpack.c.l.b16 %v774
      %v839 = vunpack.c.l.b16 %v775
      %v840 = vunpack.c.l.b16 %v776
      %v841 = vunpack.c.l.b16 %v777
      %v842 = vunpack.c.l.b16 %v778
      %v843 = vunpack.c.l.b16 %v779
      %v844 = vunpack.c.l.b16 %v780
      %v845 = vunpack.c.l.b16 %v781
      %v846 = vunpack.c.l.b16 %v782
      %v847 = vunpack.c.l.b16 %v783
      %v848 = vunpack.c.l.b16 %v784
      %v849 = vunpack.c.l.b16 %v785
      %v850 = vunpack.c.l.b16 %v786
      %v851 = vunpack.c.l.b16 %v787
      %v852 = vunpack.c.l.b16 %v788
      %v853 = vunpack.c.l.b16 %v789
      %v854 = vunpack.c.l.b16 %v790
      %v855 = vunpack.c.l.b16 %v791
      %v856 = vunpack.c.l.b16 %v792
      %v857 = vunpack.c.l.b16 %v793
      %v858 = vunpack.c.l.b16 %v794
      %v859 = vunpack.c.l.b16 %v795
      %v860 = vunpack.c.l.b16 %v796
      %v861 = vunpack.c.l.b16 %v797
      %v862 = vunpack.c.l.b16 %v798
      %v863 = vpack.c.b16 %v832, %v831
      %v864 = vpack.c.b16 %v834, %v833
      %v865 = vpack.c.b16 %v836, %v835
      %v866 = vpack.c.b16 %v838, %v837
      %v867 = vpack.c.b16 %v840, %v839
      %v868 = vpack.c.b16 %v842, %v841
      %v869 = vpack.c.b16 %v844, %v843
      %v870 = vpack.c.b16 %v846, %v845
      %v871 = vpack.c.b16 %v848, %v847
      %v872 = vpack.c.b16 %v850, %v849
      %v873 = vpack.c.b16 %v852, %v851
      %v874 = vpack.c.b16 %v854, %v853
      %v875 = vpack.c.b16 %v856, %v855
      %v876 = vpack.c.b16 %v858, %v857
      %v877 = vpack.c.b16 %v860, %v859
      %v878 = vpack.c.b16 %v862, %v861
      %895 = vmatprep.subr.bf16.mxu0 0
      %896 = vmatpush1.bf16.msra.mxu0 %v863
      %897 = vmatprep.subr.bf16.mxu0 0
      %898 = vmatpush1.bf16.msra.mxu0 %v864
      %899 = vmatprep.subr.bf16.mxu0 0
      %900 = vmatpush1.bf16.msra.mxu0 %v865
      %901 = vmatprep.subr.bf16.mxu0 0
      %902 = vmatpush1.bf16.msra.mxu0 %v866
      %903 = vmatprep.subr.bf16.mxu0 0
      %904 = vmatpush1.bf16.msra.mxu0 %v867
      %905 = vmatprep.subr.bf16.mxu0 0
      %906 = vmatpush1.bf16.msra.mxu0 %v868
      %907 = vmatprep.subr.bf16.mxu0 0
      %908 = vmatpush1.bf16.msra.mxu0 %v869
      %909 = vmatprep.subr.bf16.mxu0 0
      %910 = vmatpush1.bf16.msra.mxu0 %v870
      %911 = vmatprep.subr.bf16.mxu0 0
      %912 = vmatpush1.bf16.msra.mxu0 %v871
      %913 = vmatprep.subr.bf16.mxu0 0
      %914 = vmatpush1.bf16.msra.mxu0 %v872
      %915 = vmatprep.subr.bf16.mxu0 0
      %916 = vmatpush1.bf16.msra.mxu0 %v873
      %917 = vmatprep.subr.bf16.mxu0 0
      %918 = vmatpush1.bf16.msra.mxu0 %v874
      %919 = vmatprep.subr.bf16.mxu0 0
      %920 = vmatpush1.bf16.msra.mxu0 %v875
      %921 = vmatprep.subr.bf16.mxu0 0
      %922 = vmatpush1.bf16.msra.mxu0 %v876
      %923 = vmatprep.subr.bf16.mxu0 0
      %924 = vmatpush1.bf16.msra.mxu0 %v877
      %925 = vmatprep.subr.bf16.mxu0 0
      %926 = vmatpush1.bf16.msra.mxu0 %v878
      %927 = vmatprep.mubr.bf16.mxu0 %v766
      %928 = vmatmul.mubr.bf16.gmra.mrb[0].mxu0 %v765
      %v929 = vpop.f32.mrb[0].mxu0
      %v930 = vadd.f32 0.0, %v929
      %v931 = vpop.f32.mrb[0].mxu0
      %v932 = vpop.f32.mrb[0].mxu0
      %v933 = vadd.f32 0.0, %v932
      %v934 = vpop.f32.mrb[0].mxu0
      %935 = vdwg.mxu0
      %v936 = vld [vmem:[%s8] sm:$0x1]
      %v938 = vlaneseq
      %v939 = vshrl.u32 %v938, 7
      %v940 = vsub.s32 0, %v939
      %v941 = vrot.slane %v936, %v940
      %v943 = vmul.f32 %v930, %v941
      %v944 = vmul.f32 %v933, %v941
      %v945 = vld [vmem:[%s9] sm:$0x1]
      %v947 = vlaneseq
      %v948 = vshrl.u32 %v947, 7
      %v949 = vsub.s32 0, %v948
      %v950 = vrot.slane %v945, %v949
      %v952 = vadd.f32 %v943, %v950
      %v953 = vadd.f32 %v944, %v950
      %vm954 = vcmp.gt.f32.partialorder %v952, 0.0
      %vm955 = vcmp.gt.f32.partialorder %v953, 0.0
      %v956 = vmul.f32 %v952, 0.01
      %v957 = vmul.f32 %v953, 0.01
      %v958 = vsel %vm954, %v952, %v956
      %v959 = vsel %vm955, %v953, %v957
      %v960 = vrot.slane %v958, 1
      %v961 = vrot.slane %v959, 1
      %v962 = vsel %vm498, %v960, %v961
      %v963 = vsel %vm498, %v961, %v960
      %v964 = vmax.f32 %v958, %v962
      %v965 = vmax.f32 %v959, %v963
      %v966 = vrot.slane %v964, 7
      %v967 = vrot.slane %v965, 7
      %v968 = vsel %vm453, %v966, %v967
      %v969 = vsel %vm453, %v967, %v966
      %v970 = vsel %vm558, %v969, 0.0
      %v971 = vsel %vm559, %v968, 0.0
      %vm972 = vcmp.lt.s32.totalorder %v445, 12
      %vm973 = vcmp.lt.s32.totalorder %v446, 12
      %v974 = vrot.slane %v964, 1
      %v975 = vrot.slane %v965, 1
      %v976 = vsel %vm498, %v974, %v975
      %v977 = vsel %vm498, %v975, %v974
      %v978 = vsel %vm972, 1, 0
      %v979 = vsel %vm973, 1, 0
      %vm980 = vcmp.eq.s32.totalorder %v978, 1
      %vm981 = vcmp.eq.s32.totalorder %v979, 1
      %v982 = vsel %vm980, %v976, 0.0
      %v983 = vsel %vm981, %v977, 0.0
      %v984 = vpack.c.bf16 %v971, %v970
      %v985 = vpack.c.bf16 %v965, %v964
      %v986 = vpack.c.bf16 %v983, %v982
      %v987 = vld [vmem:[%s10] sm:$0xf]
      %v988 = vld [vmem:[%s10 + $0x4] sm:$0xf]
      %v989 = vld [vmem:[%s10 + $0x8] sm:$0xf]
      %v990 = vld [vmem:[%s10 + $0xc] sm:$0xf]
      %v991 = vld [vmem:[%s10 + $0x10] sm:$0xf]
      %v992 = vld [vmem:[%s10 + $0x14] sm:$0xf]
      %v993 = vld [vmem:[%s10 + $0x18] sm:$0xf]
      %v994 = vld [vmem:[%s10 + $0x1c] sm:$0xf]
      %v995 = vld [vmem:[%s10 + $0x20] sm:$0xf]
      %v996 = vld [vmem:[%s10 + $0x24] sm:$0xf]
      %v997 = vld [vmem:[%s10 + $0x28] sm:$0xf]
      %v998 = vld [vmem:[%s10 + $0x2c] sm:$0xf]
      %v999 = vld [vmem:[%s10 + $0x30] sm:$0xf]
      %v1000 = vld [vmem:[%s10 + $0x34] sm:$0xf]
      %v1001 = vld [vmem:[%s10 + $0x38] sm:$0xf]
      %v1002 = vld [vmem:[%s10 + $0x3c] sm:$0xf]
      %v1003 = vld [vmem:[%s10 + $0x40] sm:$0xf]
      %v1004 = vld [vmem:[%s10 + $0x44] sm:$0xf]
      %v1005 = vld [vmem:[%s10 + $0x48] sm:$0xf]
      %v1006 = vld [vmem:[%s10 + $0x4c] sm:$0xf]
      %v1007 = vld [vmem:[%s10 + $0x50] sm:$0xf]
      %v1008 = vld [vmem:[%s10 + $0x54] sm:$0xf]
      %v1009 = vld [vmem:[%s10 + $0x58] sm:$0xf]
      %v1010 = vld [vmem:[%s10 + $0x5c] sm:$0xf]
      %v1011 = vld [vmem:[%s10 + $0x60] sm:$0xf]
      %v1012 = vld [vmem:[%s10 + $0x64] sm:$0xf]
      %v1013 = vld [vmem:[%s10 + $0x68] sm:$0xf]
      %v1014 = vld [vmem:[%s10 + $0x6c] sm:$0xf]
      %v1015 = vld [vmem:[%s10 + $0x70] sm:$0xf]
      %v1016 = vld [vmem:[%s10 + $0x74] sm:$0xf]
      %v1017 = vld [vmem:[%s10 + $0x78] sm:$0xf]
      %v1018 = vld [vmem:[%s10 + $0x7c] sm:$0xf]
      %v1019 = vld [vmem:[%s10 + $0x80] sm:$0xf]
      %v1020 = vld [vmem:[%s10 + $0x84] sm:$0xf]
      %v1021 = vld [vmem:[%s10 + $0x88] sm:$0xf]
      %v1022 = vld [vmem:[%s10 + $0x8c] sm:$0xf]
      %v1023 = vld [vmem:[%s10 + $0x90] sm:$0xf]
      %v1024 = vld [vmem:[%s10 + $0x94] sm:$0xf]
      %v1025 = vld [vmem:[%s10 + $0x98] sm:$0xf]
      %v1026 = vld [vmem:[%s10 + $0x9c] sm:$0xf]
      %v1027 = vld [vmem:[%s10 + $0xa0] sm:$0xf]
      %v1028 = vld [vmem:[%s10 + $0xa4] sm:$0xf]
      %v1029 = vld [vmem:[%s10 + $0xa8] sm:$0xf]
      %v1030 = vld [vmem:[%s10 + $0xac] sm:$0xf]
      %v1031 = vld [vmem:[%s10 + $0xb0] sm:$0xf]
      %v1032 = vld [vmem:[%s10 + $0xb4] sm:$0xf]
      %v1033 = vld [vmem:[%s10 + $0xb8] sm:$0xf]
      %v1034 = vld [vmem:[%s10 + $0xbc] sm:$0xf]
      %v1083 = vunpack.c.l.b16 %v987
      %v1084 = vunpack.c.l.b16 %v988
      %v1085 = vunpack.c.l.b16 %v989
      %v1086 = vunpack.c.l.b16 %v990
      %v1087 = vunpack.c.l.b16 %v991
      %v1088 = vunpack.c.l.b16 %v992
      %v1089 = vunpack.c.l.b16 %v993
      %v1090 = vunpack.c.l.b16 %v994
      %v1091 = vunpack.c.l.b16 %v995
      %v1092 = vunpack.c.l.b16 %v996
      %v1093 = vunpack.c.l.b16 %v997
      %v1094 = vunpack.c.l.b16 %v998
      %v1095 = vunpack.c.l.b16 %v999
      %v1096 = vunpack.c.l.b16 %v1000
      %v1097 = vunpack.c.l.b16 %v1001
      %v1098 = vunpack.c.l.b16 %v1002
      %v1099 = vunpack.c.l.b16 %v1003
      %v1100 = vunpack.c.l.b16 %v1004
      %v1101 = vunpack.c.l.b16 %v1005
      %v1102 = vunpack.c.l.b16 %v1006
      %v1103 = vunpack.c.l.b16 %v1007
      %v1104 = vunpack.c.l.b16 %v1008
      %v1105 = vunpack.c.l.b16 %v1009
      %v1106 = vunpack.c.l.b16 %v1010
      %v1107 = vunpack.c.l.b16 %v1011
      %v1108 = vunpack.c.l.b16 %v1012
      %v1109 = vunpack.c.l.b16 %v1013
      %v1110 = vunpack.c.l.b16 %v1014
      %v1111 = vunpack.c.l.b16 %v1015
      %v1112 = vunpack.c.l.b16 %v1016
      %v1113 = vunpack.c.l.b16 %v1017
      %v1114 = vunpack.c.l.b16 %v1018
      %v1115 = vunpack.c.l.b16 %v1019
      %v1116 = vunpack.c.l.b16 %v1020
      %v1117 = vunpack.c.l.b16 %v1021
      %v1118 = vunpack.c.l.b16 %v1022
      %v1119 = vunpack.c.l.b16 %v1023
      %v1120 = vunpack.c.l.b16 %v1024
      %v1121 = vunpack.c.l.b16 %v1025
      %v1122 = vunpack.c.l.b16 %v1026
      %v1123 = vunpack.c.l.b16 %v1027
      %v1124 = vunpack.c.l.b16 %v1028
      %v1125 = vunpack.c.l.b16 %v1029
      %v1126 = vunpack.c.l.b16 %v1030
      %v1127 = vunpack.c.l.b16 %v1031
      %v1128 = vunpack.c.l.b16 %v1032
      %v1129 = vunpack.c.l.b16 %v1033
      %v1130 = vunpack.c.l.b16 %v1034
      %v1131 = vpack.c.b16 %v1084, %v1083
      %v1132 = vpack.c.b16 %v1086, %v1085
      %v1133 = vpack.c.b16 %v1088, %v1087
      %v1134 = vpack.c.b16 %v1090, %v1089
      %v1135 = vpack.c.b16 %v1092, %v1091
      %v1136 = vpack.c.b16 %v1094, %v1093
      %v1137 = vpack.c.b16 %v1096, %v1095
      %v1138 = vpack.c.b16 %v1098, %v1097
      %v1139 = vpack.c.b16 %v1100, %v1099
      %v1140 = vpack.c.b16 %v1102, %v1101
      %v1141 = vpack.c.b16 %v1104, %v1103
      %v1142 = vpack.c.b16 %v1106, %v1105
      %v1143 = vpack.c.b16 %v1108, %v1107
      %v1144 = vpack.c.b16 %v1110, %v1109
      %v1145 = vpack.c.b16 %v1112, %v1111
      %v1146 = vpack.c.b16 %v1114, %v1113
      %v1147 = vpack.c.b16 %v1116, %v1115
      %v1148 = vpack.c.b16 %v1118, %v1117
      %v1149 = vpack.c.b16 %v1120, %v1119
      %v1150 = vpack.c.b16 %v1122, %v1121
      %v1151 = vpack.c.b16 %v1124, %v1123
      %v1152 = vpack.c.b16 %v1126, %v1125
      %v1153 = vpack.c.b16 %v1128, %v1127
      %v1154 = vpack.c.b16 %v1130, %v1129
      %1179 = vmatprep.subr.bf16.mxu0 0
      %1180 = vmatpush1.bf16.msra.mxu0 %v1131
      %1181 = vmatprep.subr.bf16.mxu0 0
      %1182 = vmatpush1.bf16.msra.mxu0 %v1132
      %1183 = vmatprep.subr.bf16.mxu0 0
      %1184 = vmatpush1.bf16.msra.mxu0 %v1133
      %1185 = vmatprep.subr.bf16.mxu0 0
      %1186 = vmatpush1.bf16.msra.mxu0 %v1134
      %1187 = vmatprep.subr.bf16.mxu0 0
      %1188 = vmatpush1.bf16.msra.mxu0 %v1135
      %1189 = vmatprep.subr.bf16.mxu0 0
      %1190 = vmatpush1.bf16.msra.mxu0 %v1136
      %1191 = vmatprep.subr.bf16.mxu0 0
      %1192 = vmatpush1.bf16.msra.mxu0 %v1137
      %1193 = vmatprep.subr.bf16.mxu0 0
      %1194 = vmatpush1.bf16.msra.mxu0 %v1138
      %1195 = vmatprep.subr.bf16.mxu0 0
      %1196 = vmatpush1.bf16.msra.mxu0 %v1139
      %1197 = vmatprep.subr.bf16.mxu0 0
      %1198 = vmatpush1.bf16.msra.mxu0 %v1140
      %1199 = vmatprep.subr.bf16.mxu0 0
      %1200 = vmatpush1.bf16.msra.mxu0 %v1141
      %1201 = vmatprep.subr.bf16.mxu0 0
      %1202 = vmatpush1.bf16.msra.mxu0 %v1142
      %1203 = vmatprep.subr.bf16.mxu0 0
      %1204 = vmatpush1.bf16.msra.mxu0 %v1143
      %1205 = vmatprep.subr.bf16.mxu0 0
      %1206 = vmatpush1.bf16.msra.mxu0 %v1144
      %1207 = vmatprep.subr.bf16.mxu0 0
      %1208 = vmatpush1.bf16.msra.mxu0 %v1145
      %1209 = vmatprep.subr.bf16.mxu0 0
      %1210 = vmatpush1.bf16.msra.mxu0 %v1146
      %1211 = vmatprep.mubr.bf16.mxu0 %v985
      %1212 = vmatmul.mubr.bf16.gmra.mrb[0].mxu0 %v984
      %v1213 = vpop.f32.mrb[0].mxu0
      %v1214 = vadd.f32 0.0, %v1213
      %v1215 = vpop.f32.mrb[0].mxu0
      %v1216 = vpop.f32.mrb[0].mxu0
      %v1217 = vadd.f32 0.0, %v1216
      %v1218 = vpop.f32.mrb[0].mxu0
      %1219 = vdwg.mxu0
      %1220 = vmatprep.subr.bf16.mxu0 0
      %1221 = vmatpush1.bf16.msra.mxu0 %v1147
      %1222 = vmatprep.subr.bf16.mxu0 0
      %1223 = vmatpush1.bf16.msra.mxu0 %v1148
      %1224 = vmatprep.subr.bf16.mxu0 0
      %1225 = vmatpush1.bf16.msra.mxu0 %v1149
      %1226 = vmatprep.subr.bf16.mxu0 0
      %1227 = vmatpush1.bf16.msra.mxu0 %v1150
      %1228 = vmatprep.subr.bf16.mxu0 0
      %1229 = vmatpush1.bf16.msra.mxu0 %v1151
      %1230 = vmatprep.subr.bf16.mxu0 0
      %1231 = vmatpush1.bf16.msra.mxu0 %v1152
      %1232 = vmatprep.subr.bf16.mxu0 0
      %1233 = vmatpush1.bf16.msra.mxu0 %v1153
      %1234 = vmatprep.subr.bf16.mxu0 0
      %1235 = vmatpush1.bf16.msra.mxu0 %v1154
      %1236 = vmatprep.subr.bf16.mxu0 0
      %1237 = vmatpush1.bf16.msra.mxu0 0
      %1238 = vmatprep.subr.bf16.mxu0 0
      %1239 = vmatpush1.bf16.msra.mxu0 0
      %1240 = vmatprep.subr.bf16.mxu0 0
      %1241 = vmatpush1.bf16.msra.mxu0 0
      %1242 = vmatprep.subr.bf16.mxu0 0
      %1243 = vmatpush1.bf16.msra.mxu0 0
      %1244 = vmatprep.subr.bf16.mxu0 0
      %1245 = vmatpush1.bf16.msra.mxu0 0
      %1246 = vmatprep.subr.bf16.mxu0 0
      %1247 = vmatpush1.bf16.msra.mxu0 0
      %1248 = vmatprep.subr.bf16.mxu0 0
      %1249 = vmatpush1.bf16.msra.mxu0 0
      %1250 = vmatprep.subr.bf16.mxu0 0
      %1251 = vmatpush1.bf16.msra.mxu0 0
      %1252 = vmatprep.mubr.bf16.mxu0 0
      %1253 = vmatmul.mubr.bf16.gmra.mrb[0].mxu0 %v986
      %v1254 = vpop.f32.mrb[0].mxu0
      %v1255 = vadd.f32 %v1214, %v1254
      %v1256 = vpop.f32.mrb[0].mxu0
      %v1257 = vpop.f32.mrb[0].mxu0
      %v1258 = vadd.f32 %v1217, %v1257
      %v1259 = vpop.f32.mrb[0].mxu0
      %1260 = vdwg.mxu0
      %v1261 = vld [vmem:[%s11] sm:$0x1]
      %v1263 = vlaneseq
      %v1264 = vshrl.u32 %v1263, 7
      %v1265 = vsub.s32 0, %v1264
      %v1266 = vrot.slane %v1261, %v1265
      %v1268 = vmul.f32 %v1255, %v1266
      %v1269 = vmul.f32 %v1258, %v1266
      %v1270 = vld [vmem:[%s12] sm:$0x1]
      %v1272 = vlaneseq
      %v1273 = vshrl.u32 %v1272, 7
      %v1274 = vsub.s32 0, %v1273
      %v1275 = vrot.slane %v1270, %v1274
      %v1277 = vadd.f32 %v1268, %v1275
      %v1278 = vadd.f32 %v1269, %v1275
      %vm1279 = vcmp.gt.f32.partialorder %v1277, 0.0
      %vm1280 = vcmp.gt.f32.partialorder %v1278, 0.0
      %v1281 = vmul.f32 %v1277, 0.01
      %v1282 = vmul.f32 %v1278, 0.01
      %v1283 = vsel %vm1279, %v1277, %v1281
      %v1284 = vsel %vm1280, %v1278, %v1282
      %v1285 = vrot.slane %v1283, 1
      %v1286 = vrot.slane %v1284, 1
      %v1287 = vsel %vm498, %v1285, %v1286
      %v1288 = vsel %vm498, %v1286, %v1285
      %v1289 = vmax.f32 %v1283, %v1287
      %v1290 = vmax.f32 %v1284, %v1288
      %1291 = vst.msk [vmem:[%s442] sm:$0xff] %vm593, %v1289
      %1292 = vst.msk [vmem:[%s442 + $0x8] sm:$0xff] %vm593, %v1290
      %p1293 = scmp.lt.s32.totalorder %s24, 1
      %s1294 = scalar_select %p1293, %s24, 1
      %s1295 = smul.addr %s1294, 2
      %s1296 = smul.addr %s1295, 8
      %s1297 = scalar_lea.vmem %s13, %s1296
      // Predicated region
      $region73: #{signal_encoder.1} parent=71 // pred_check
        %p1298 = pneg %p320
      $region74: #{signal_encoder.1} parent=71 // pred_check_branch
        %1300 = sbr.rel (%p1298) target = $region76
      $region75: #{signal_encoder.1} parent=71 // pred_region
        _
      $region76: #{signal_encoder.1} parent=71 // pred_fallthru
        _
    $region72: #{signal_encoder.1} parent=5 // pred_fallthru
      _
    %p1301 = scmp.le.s32.totalorder 2, %s19
    // Predicated region
    $region77: #{signal_encoder.1} parent=5 // pred_check
      %p1302 = pneg %p1301
    $region78: #{signal_encoder.1} parent=5 // pred_check_branch
      %1304 = sbr.rel (%p1302) target = $region80
    $region79: #{signal_encoder.1} parent=5 // pred_region
      %s1305 = ssub.s32 %s19, 2
      // Predicated region
      $region81: #{signal_encoder.1} parent=79 // pred_check
        %p1306 = pneg %p326
      $region82: #{signal_encoder.1} parent=79 // pred_check_branch
        %1308 = sbr.rel (%p1306) target = $region84
      $region83: #{signal_encoder.1} parent=79 // pred_region
        %p1309 = scmp.lt.s32.totalorder %s25, 1
        %s1310 = scalar_select %p1309, %s25, 1
        %s1311 = smul.addr %s1310, 2
        %s1312 = smul.addr %s1311, 8
        %s1313 = scalar_lea.vmem %s13, %s1312
      $region84: #{signal_encoder.1} parent=79 // pred_fallthru
        _
    $region80: #{signal_encoder.1} parent=5 // pred_fallthru
      _
  $region6: #{signal_encoder.1} parent=0 // loop_footer
    %s23 = sadd.s32 1, %s19
  $region7: #{signal_encoder.1} parent=0 // loop_footer_branch
    %18 = sbr.rel target = $region3
  $region8: #{signal_encoder.1} parent=0 // loop_exit
    _

</llo_original>
